<compile_context>
chip_gen: v5e
topology: v5e:2x2
jax: 0.10.0
libtpu: 0.0.40
codegen_flags: <defaults>
</compile_context>

<pallas_src>
import jax
import jax.numpy as jnp
from jax.experimental import pallas as pl
from jax.experimental.pallas import tpu as pltpu

N_TYPES = 4  # [machine, operation-pre, operation-sub, operation-self]


def _elu(x):
    # PyTorch nn.ELU(alpha=1.0).  Clamp the exp argument so the discarded
    # positive branch never overflows before the select.
    return jnp.where(x > 0, x, jnp.exp(jnp.minimum(x, 0.0)) - 1.0)


def _block_diag(blocks):
    rows = sum(b.shape[0] for b in blocks)
    cols = sum(b.shape[1] for b in blocks)
    out = jnp.zeros((rows, cols), blocks[0].dtype)
    r = c = 0
    for b in blocks:
        out = out.at[r:r + b.shape[0], c:c + b.shape[1]].set(b)
        r += b.shape[0]
        c += b.shape[1]
    return out


def _tile_bytes(rows, cols, itemsize):
    """VMEM bytes of a (rows, cols) buffer after (8, 128) tile padding."""
    return (-(-rows // 8) * 8) * (-(-cols // 128) * 128) * itemsize


# ----------------------------- kernel -----------------------------------------

def mlps_kernel(adj_ma_ref, adj_presub_ref, f_ope_ref, f_ma_ref,
                w1_ref, b1_ref, w2_ref, b2_ref, w3_ref, b3_ref,
                wf1_ref, bf1_ref, wf2_ref, bf2_ref, wf3_ref, bf3_ref,
                out_ref):
    bt, n_ope, d_ope = f_ope_ref.shape
    out_w = wf3_ref.shape[-1]

    f_ope = f_ope_ref[...]                               # (bt, n_ope, d_ope) f32
    f_ma = f_ma_ref[...]                                 # (bt, n_ma,  d_ma)  f32

    # ---- neighbor aggregation ------------------------------------------------
    # Adjacency arrives as bf16 (0/1 exact); promotion to f32 happens inside
    # the dot with f32 accumulation.  'pre' and 'sub' share one batched matmul
    # (their adjacencies are stacked along the row axis in the wrapper); the
    # 'self' aggregation is the identity so f_ope is used directly.
    agg_ma = jnp.einsum('bnm,bmd->bnd', adj_ma_ref[...], f_ma,
                        preferred_element_type=jnp.float32)
    agg_ps = jnp.einsum('bnm,bmd->bnd', adj_presub_ref[...], f_ope,
                        preferred_element_type=jnp.float32)

    # ---- flatten batch into the matmul M dimension ---------------------------
    m = bt * n_ope
    x_cat = jnp.concatenate(
        [agg_ma.reshape(m, agg_ma.shape[-1]),
         agg_ps[:, :n_ope, :].reshape(m, d_ope),
         agg_ps[:, n_ope:, :].reshape(m, d_ope),
         f_ope.reshape(m, d_ope)], axis=-1)              # (M, d_ma + 3*d_ope)

    # MLPsim layers 1..3 for all four types fused with block-diagonal weights
    # (the four types live in disjoint lane blocks of the hidden activations).
    h1 = _elu(jnp.dot(x_cat, w1_ref[...],
                      preferred_element_type=jnp.float32) + b1_ref[...])   # (M, 4H)
    h2 = _elu(jnp.dot(h1, w2_ref[...],
                      preferred_element_type=jnp.float32) + b2_ref[...])   # (M, 4H)
    emb = (jnp.dot(h2, w3_ref[...], preferred_element_type=jnp.float32)
           + b3_ref[...])                                # (M, 4*out) == concat of embeddings

    # Final projection: ELU -> Linear -> ELU -> Linear -> ELU -> Linear.
    h = _elu(jnp.dot(_elu(emb), wf1_ref[...],
                     preferred_element_type=jnp.float32) + bf1_ref[...])
    h = _elu(jnp.dot(h, wf2_ref[...],
                     preferred_element_type=jnp.float32) + bf2_ref[...])
    out2d = (jnp.dot(h, wf3_ref[...], preferred_element_type=jnp.float32)
             + bf3_ref[...])                             # (M, out)

    # ---- lane-dense output slab ----------------------------------------------
    # out_ref is (bt, n_ope*out): node n's embedding goes to lanes
    # [n*out, (n+1)*out).  Static column stores do the sublane->lane relayout
    # (no reliance on Mosaic cross-lane reshape support); the output VMEM
    # buffer is lane-dense and the HBM writeback DMA is dense.
    # TODO(synk): for very large n_ope, a single out2d.reshape(bt, n_ope*out)
    # relayout (if the Mosaic dump shows it lowers densely) would shrink the IR.
    out3d = out2d.reshape(bt, n_ope, out_w)              # leading-dim split only
    for n in range(n_ope):
        out_ref[:, n * out_w:(n + 1) * out_w] = out3d[:, n, :]


# ----------------------------- specs / wrapper ---------------------------------

def _batched_spec(x, bt):
    trailing = x.ndim - 1
    return pl.BlockSpec((bt,) + tuple(x.shape[1:]),
                        lambda b, _t=trailing: (b,) + (0,) * _t)


def _param_spec(x, single_buffer):
    nd = x.ndim
    index_map = lambda b, _n=nd: (0,) * _n
    if single_buffer:
        # Grid-invariant parameters: the index_map is constant, so one VMEM
        # buffer suffices (no double buffering) -> frees VMEM headroom (v7x).
        return pl.BlockSpec(tuple(x.shape), index_map,
                            pipeline_mode=pl.Buffered(1))
    return pl.BlockSpec(tuple(x.shape), index_map)


def mlps_forward(ope_ma_adj, ope_pre_adj, ope_sub_adj, batch_idxes, feats,
                 sim_params, final_params, out_size, batch_tile=None):
    ope_feat, ma_feat = feats[0], feats[1]

    # Gather uncompleted instances.  Adjacency is shipped as bf16 (0/1 exact)
    # to halve DMA bytes of the largest per-step inputs; features/activations
    # stay f32 (exact vs. the f32 reference; v5e VPU/EUP have no bf16 path).
    # TODO(synk): when batch_idxes is chunk-contiguous, move this gather into
    # the pipeline (PrefetchScalarGridSpec(num_scalar_prefetch=1) plus an
    # index_map reading the idx ref) to drop the extra HBM round trip.
    adj_ma = ope_ma_adj[batch_idxes].astype(jnp.bfloat16)
    adj_pre = ope_pre_adj[batch_idxes].astype(jnp.bfloat16)
    adj_sub = ope_sub_adj[batch_idxes].astype(jnp.bfloat16)
    # Merge the 'pre' and 'sub' aggregations into one batched matmul by
    # stacking the two adjacencies along the row (node) axis.
    adj_presub = jnp.concatenate([adj_pre, adj_sub], axis=1)
    ope_feat = ope_feat.astype(jnp.float32)
    ma_feat = ma_feat.astype(jnp.float32)

    B, n_ope, n_ma = adj_ma.shape
    d_ope = ope_feat.shape[-1]
    d_ma = ma_feat.shape[-1]
    slab = n_ope * out_size

    # ---- VMEM budget & batch tile (per-generation sizing) --------------------
    try:
        vmem_cap = int(pltpu.get_tpu_info().vmem_capacity_bytes)
        if vmem_cap <= 0:
            raise ValueError("bad vmem capacity")
    except Exception:
        vmem_cap = 128 * 1024 * 1024          # v5e/v6e; v7x reports 64 MiB
    # Explicit scoped-VMEM limit: the defaults (16 MiB v5e / 32 MiB v6e+)
    # would cap the tile size long before physical VMEM does.
    vmem_limit = int(min((vmem_cap * 3) // 4, 96 * 1024 * 1024))

    if batch_tile is None:
        # Double-buffered per-instance footprint of the pipelined data tiles
        # (padded to (8, 128) VMEM tiles); keep half the budget for
        # activations, parameters and compiler scratch.
        per_inst = 2 * (_tile_bytes(n_ope, n_ma, 2)
                        + _tile_bytes(2 * n_ope, n_ope, 2)
                        + _tile_bytes(n_ope, d_ope, 4)
                        + _tile_bytes(n_ma, d_ma, 4)
                        + _tile_bytes(1, slab, 4))
        batch_tile = max(1, min(64, (vmem_limit // 2) // per_inst))
        # Keep >= 2 grid chunks for large batches so both of v7x's
        # TensorCores get work on the "parallel" batch-chunk axis.
        if B >= 16 and batch_tile * 2 > B:
            batch_tile = -(-B // 2)

    bt = min(B, batch_tile)
    if bt < B:
        # Multi-chunk grids need a sublane-aligned batch tile so the 2-D
        # lane-dense output block satisfies the (8, 128) rule.
        bt = min(B, max(8, -(-bt // 8) * 8))
    n_chunks = -(-B // bt)
    b_pad = n_chunks * bt
    if b_pad != B:
        pad = b_pad - B
        padb = lambda x: jnp.pad(x, ((0, pad),) + ((0, 0),) * (x.ndim - 1))
        adj_ma, adj_presub = padb(adj_ma), padb(adj_presub)
        ope_feat, ma_feat = padb(ope_feat), padb(ma_feat)

    # ---- pack per-type MLPsim parameters (block-diagonal fusion) -------------
    # Layer 1: block-diag (d_ma + 3*d_ope, 4H) -> ONE matmul for all types.
    # Layers 2/3: block-diag (4H, 4H) / (4H, 4*out).  With hidden=32, 4H=128
    # is one MXU pass on v5e / half a pass on v6e+v7x; if hidden ever grows so
    # 4H >> 256, revert layers 2/3 to per-type matmuls (75% of the fused FLOPs
    # are structural zeros).
    w1bd = _block_diag([p[0] for p in sim_params])                 # (d_tot, 4H)
    b1cat = jnp.concatenate([p[1] for p in sim_params], axis=-1)   # (1, 4H)
    w2bd = _block_diag([p[2] for p in sim_params])                 # (4H, 4H)
    b2cat = jnp.concatenate([p[3] for p in sim_params], axis=-1)   # (1, 4H)
    w3bd = _block_diag([p[4] for p in sim_params])                 # (4H, 4*out)
    b3cat = jnp.concatenate([p[5] for p in sim_params], axis=-1)   # (1, 4*out)
    wf1, bf1, wf2, bf2, wf3, bf3 = final_params

    data_inputs = [adj_ma, adj_presub, ope_feat, ma_feat]
    param_inputs = [w1bd, b1cat, w2bd, b2cat, w3bd, b3cat,
                    wf1, bf1, wf2, bf2, wf3, bf3]

    def _run(single_buffer_params):
        in_specs = ([_batched_spec(x, bt) for x in data_inputs]
                    + [_param_spec(x, single_buffer_params)
                       for x in param_inputs])
        return pl.pallas_call(
            mlps_kernel,
            out_shape=jax.ShapeDtypeStruct((b_pad, slab), jnp.float32),
            grid_spec=pltpu.PrefetchScalarGridSpec(
                num_scalar_prefetch=0,
                grid=(n_chunks,),
                in_specs=in_specs,
                out_specs=pl.BlockSpec((bt, slab), lambda b: (b, 0)),
            ),
            compiler_params=pltpu.CompilerParams(
                dimension_semantics=("parallel",),
                vmem_limit_bytes=vmem_limit),
        )(*data_inputs, *param_inputs)

    try:
        out = _run(True)     # single-buffer the grid-invariant parameter refs
    except Exception:        # fallback if this jax rejects pl.Buffered(1)
        out = _run(False)

    return out[:B].reshape(B, n_ope, out_size)


# ---------------- deterministic parameter init (PyTorch Linear-style) ----------

def _linear_init(key, fan_in, fan_out):
    k1, k2 = jax.random.split(key)
    bound = 1.0 / (fan_in ** 0.5)
    w = jax.random.uniform(k1, (fan_in, fan_out), jnp.float32, -bound, bound)
    b = jax.random.uniform(k2, (1, fan_out), jnp.float32, -bound, bound)
    return w, b


def init_params(key, in_sizes, hidden, out):
    keys = jax.random.split(key, 3 * len(in_sizes) + 3)
    ki = 0
    sim = []
    for d_in in in_sizes:
        w1, b1 = _linear_init(keys[ki], d_in, hidden); ki += 1
        w2, b2 = _linear_init(keys[ki], hidden, hidden); ki += 1
        w3, b3 = _linear_init(keys[ki], hidden, out); ki += 1
        sim.append((w1, b1, w2, b2, w3, b3))
    wf1, bf1 = _linear_init(keys[ki], out * len(in_sizes), hidden); ki += 1
    wf2, bf2 = _linear_init(keys[ki], hidden, hidden); ki += 1
    wf3, bf3 = _linear_init(keys[ki], hidden, out); ki += 1
    return sim, (wf1, bf1, wf2, bf2, wf3, bf3)


# ---------------- pure-JAX reference for validation ----------------------------

def mlps_reference(ope_ma_adj, ope_pre_adj, ope_sub_adj, batch_idxes, feats,
                   sim_params, final_params):
    ope_feat, ma_feat = feats[0], feats[1]
    adjs = (ope_ma_adj[batch_idxes].astype(jnp.float32),
            ope_pre_adj[batch_idxes].astype(jnp.float32),
            ope_sub_adj[batch_idxes].astype(jnp.float32),
            jnp.broadcast_to(jnp.eye(ope_feat.shape[-2], dtype=jnp.float32),
                             ope_pre_adj[batch_idxes].shape))
    h = (ma_feat, ope_feat, ope_feat, ope_feat)
    embeds = []
    for i in range(N_TYPES):
        b = jnp.einsum('bnm,bmd->bnd', adjs[i], h[i])
        w1, b1, w2, b2, w3, b3 = sim_params[i]
        z = _elu(b @ w1 + b1)
        z = _elu(z @ w2 + b2)
        embeds.append(z @ w3 + b3)
    cat = jnp.concatenate(embeds, axis=-1)
    wf1, bf1, wf2, bf2, wf3, bf3 = final_params
    z = _elu(cat)
    z = _elu(z @ wf1 + bf1)
    z = _elu(z @ wf2 + bf2)
    return z @ wf3 + bf3


if __name__ == "__main__":
    # Small FJSP-like shapes: 3 instances total, 2 uncompleted (batch_idxes),
    # 8 operation nodes, 4 machine nodes.
    B_total, N_ope, N_ma = 3, 8, 4
    in_ma, in_ope = 3, 6
    W_sizes_ope = [in_ma, in_ope, in_ope, in_ope]
    hidden_size_ope, out_size_ope = 32, 8

    key = jax.random.PRNGKey(0)
    k_adj1, k_adj2, k_adj3, k_fo, k_fm, k_par = jax.random.split(key, 6)

    ope_ma_adj = (jax.random.uniform(k_adj1, (B_total, N_ope, N_ma)) > 0.5
                  ).astype(jnp.int32)
    ope_pre_adj = (jax.random.uniform(k_adj2, (B_total, N_ope, N_ope)) > 0.7
                   ).astype(jnp.int32)
    ope_sub_adj = (jax.random.uniform(k_adj3, (B_total, N_ope, N_ope)) > 0.7
                   ).astype(jnp.int32)
    batch_idxes = jnp.array([0, 2], dtype=jnp.int32)

    ope_feat = jax.random.normal(k_fo, (batch_idxes.shape[0], N_ope, in_ope),
                                 jnp.float32)
    ma_feat = jax.random.normal(k_fm, (batch_idxes.shape[0], N_ma, in_ma),
                                jnp.float32)
    feats = (ope_feat, ma_feat)

    sim_params, final_params = init_params(k_par, W_sizes_ope,
                                           hidden_size_ope, out_size_ope)

    out = mlps_forward(ope_ma_adj, ope_pre_adj, ope_sub_adj, batch_idxes,
                       feats, sim_params, final_params, out_size_ope)
    out = jax.block_until_ready(out)

    ref = mlps_reference(ope_ma_adj, ope_pre_adj, ope_sub_adj, batch_idxes,
                         feats, sim_params, final_params)
    assert out.shape == (batch_idxes.shape[0], N_ope, out_size_ope)
    assert jnp.allclose(out, ref, atol=1e-4, rtol=1e-4), "mismatch vs reference"
    print("KERNEL_OK")
</pallas_src>

<mosaic_0001>
module attributes {stable_mosaic.version = 11 : i64} {
  func.func @mlps_kernel(%arg0: i32, %arg1: memref<2x8x4xbf16, #tpu.memory_space<vmem>>, %arg2: memref<2x16x8xbf16, #tpu.memory_space<vmem>>, %arg3: memref<2x8x6xf32, #tpu.memory_space<vmem>>, %arg4: memref<2x4x3xf32, #tpu.memory_space<vmem>>, %arg5: memref<21x128xf32, #tpu.memory_space<vmem>>, %arg6: memref<1x128xf32, #tpu.memory_space<vmem>>, %arg7: memref<128x128xf32, #tpu.memory_space<vmem>>, %arg8: memref<1x128xf32, #tpu.memory_space<vmem>>, %arg9: memref<128x32xf32, #tpu.memory_space<vmem>>, %arg10: memref<1x32xf32, #tpu.memory_space<vmem>>, %arg11: memref<32x32xf32, #tpu.memory_space<vmem>>, %arg12: memref<1x32xf32, #tpu.memory_space<vmem>>, %arg13: memref<32x32xf32, #tpu.memory_space<vmem>>, %arg14: memref<1x32xf32, #tpu.memory_space<vmem>>, %arg15: memref<32x8xf32, #tpu.memory_space<vmem>>, %arg16: memref<1x8xf32, #tpu.memory_space<vmem>>, %arg17: memref<2x64xf32, #tpu.memory_space<vmem>>) attributes {dimension_semantics = [#tpu.dimension_semantics<parallel>], iteration_bounds = array<i64: 1>, scalar_prefetch = 0 : i64, scratch_operands = 0 : i64, tpu.core_type = #tpu.core_type<tc>, window_params = [{transform_indices = @transform_0, window_bounds = array<i64: 2, 8, 4>}, {transform_indices = @transform_1, window_bounds = array<i64: 2, 16, 8>}, {transform_indices = @transform_2, window_bounds = array<i64: 2, 8, 6>}, {transform_indices = @transform_3, window_bounds = array<i64: 2, 4, 3>}, {pipeline_mode = #tpu.pipeline_mode<synchronous>, transform_indices = @transform_4, window_bounds = array<i64: 21, 128>}, {pipeline_mode = #tpu.pipeline_mode<synchronous>, transform_indices = @transform_5, window_bounds = array<i64: 1, 128>}, {pipeline_mode = #tpu.pipeline_mode<synchronous>, transform_indices = @transform_6, window_bounds = array<i64: 128, 128>}, {pipeline_mode = #tpu.pipeline_mode<synchronous>, transform_indices = @transform_7, window_bounds = array<i64: 1, 128>}, {pipeline_mode = #tpu.pipeline_mode<synchronous>, transform_indices = @transform_8, window_bounds = array<i64: 128, 32>}, {pipeline_mode = #tpu.pipeline_mode<synchronous>, transform_indices = @transform_9, window_bounds = array<i64: 1, 32>}, {pipeline_mode = #tpu.pipeline_mode<synchronous>, transform_indices = @transform_10, window_bounds = array<i64: 32, 32>}, {pipeline_mode = #tpu.pipeline_mode<synchronous>, transform_indices = @transform_11, window_bounds = array<i64: 1, 32>}, {pipeline_mode = #tpu.pipeline_mode<synchronous>, transform_indices = @transform_12, window_bounds = array<i64: 32, 32>}, {pipeline_mode = #tpu.pipeline_mode<synchronous>, transform_indices = @transform_13, window_bounds = array<i64: 1, 32>}, {pipeline_mode = #tpu.pipeline_mode<synchronous>, transform_indices = @transform_14, window_bounds = array<i64: 32, 8>}, {pipeline_mode = #tpu.pipeline_mode<synchronous>, transform_indices = @transform_15, window_bounds = array<i64: 1, 8>}, {transform_indices = @transform_16, window_bounds = array<i64: 2, 64>}]} {
    %c0 = arith.constant 0 : index
    %c0_0 = arith.constant 0 : index
    %c0_1 = arith.constant 0 : index
    %0 = vector.load %arg3[%c0, %c0_0, %c0_1] : memref<2x8x6xf32, #tpu.memory_space<vmem>>, vector<2x8x6xf32>
    %c0_2 = arith.constant 0 : index
    %c0_3 = arith.constant 0 : index
    %c0_4 = arith.constant 0 : index
    %1 = vector.load %arg4[%c0_2, %c0_3, %c0_4] : memref<2x4x3xf32, #tpu.memory_space<vmem>>, vector<2x4x3xf32>
    %c0_5 = arith.constant 0 : index
    %c0_6 = arith.constant 0 : index
    %c0_7 = arith.constant 0 : index
    %2 = vector.load %arg1[%c0_5, %c0_6, %c0_7] : memref<2x8x4xbf16, #tpu.memory_space<vmem>>, vector<2x8x4xbf16>
    "tpu.trace_start"() <{level = 10 : i32, message = "bnm,bmd->bnd"}> : () -> ()
    %cst = arith.constant dense<0.000000e+00> : vector<2x8x3xf32>
    %3 = tpu.matmul %2, %1, %cst {dimension_numbers = #tpu.dot_dimension_numbers<[2], [1], [1], [2], [0, 0, 0, 1, 1, 2], [0], [0]>} : vector<2x8x4xbf16>, vector<2x4x3xf32>, vector<2x8x3xf32> -> vector<2x8x3xf32>
    "tpu.trace_stop"() : () -> ()
    %c0_8 = arith.constant 0 : index
    %c0_9 = arith.constant 0 : index
    %c0_10 = arith.constant 0 : index
    %4 = vector.load %arg2[%c0_8, %c0_9, %c0_10] : memref<2x16x8xbf16, #tpu.memory_space<vmem>>, vector<2x16x8xbf16>
    "tpu.trace_start"() <{level = 10 : i32, message = "bnm,bmd->bnd"}> : () -> ()
    %cst_11 = arith.constant dense<0.000000e+00> : vector<2x16x6xf32>
    %5 = tpu.matmul %4, %0, %cst_11 {dimension_numbers = #tpu.dot_dimension_numbers<[2], [1], [1], [2], [0, 0, 0, 1, 1, 2], [0], [0]>} : vector<2x16x8xbf16>, vector<2x8x6xf32>, vector<2x16x6xf32> -> vector<2x16x6xf32>
    "tpu.trace_stop"() : () -> ()
    %6 = vector.shape_cast %3 : vector<2x8x3xf32> to vector<16x3xf32>
    %7 = vector.extract_strided_slice %5 {offsets = [0, 0, 0], sizes = [2, 8, 6], strides = [1, 1, 1]} : vector<2x16x6xf32> to vector<2x8x6xf32>
    %8 = vector.shape_cast %7 : vector<2x8x6xf32> to vector<16x6xf32>
    %9 = vector.extract_strided_slice %5 {offsets = [0, 8, 0], sizes = [2, 8, 6], strides = [1, 1, 1]} : vector<2x16x6xf32> to vector<2x8x6xf32>
    %10 = vector.shape_cast %9 : vector<2x8x6xf32> to vector<16x6xf32>
    %11 = vector.shape_cast %0 : vector<2x8x6xf32> to vector<16x6xf32>
    %12 = tpu.concatenate %6, %8, %10, %11 in 1 : vector<16x3xf32>, vector<16x6xf32>, vector<16x6xf32>, vector<16x6xf32> -> vector<16x21xf32>
    %c0_12 = arith.constant 0 : index
    %c0_13 = arith.constant 0 : index
    %13 = vector.load %arg5[%c0_12, %c0_13] : memref<21x128xf32, #tpu.memory_space<vmem>>, vector<21x128xf32>
    %cst_14 = arith.constant dense<0.000000e+00> : vector<16x128xf32>
    %14 = tpu.matmul %12, %13, %cst_14 {dimension_numbers = #tpu.dot_dimension_numbers<[1], [0], [0], [1], [0, 0, 1, 1], [], []>} : vector<16x21xf32>, vector<21x128xf32>, vector<16x128xf32> -> vector<16x128xf32>
    %c0_15 = arith.constant 0 : index
    %c0_16 = arith.constant 0 : index
    %15 = vector.load %arg6[%c0_15, %c0_16] : memref<1x128xf32, #tpu.memory_space<vmem>>, vector<1x128xf32>
    %16 = vector.broadcast %15 : vector<1x128xf32> to vector<16x128xf32>
    %17 = arith.addf %14, %16 : vector<16x128xf32>
    %cst_17 = arith.constant 0.000000e+00 : f32
    %18 = vector.broadcast %cst_17 : f32 to vector<16x128xf32>
    %19 = arith.cmpf ogt, %17, %18 : vector<16x128xf32>
    %cst_18 = arith.constant 0.000000e+00 : f32
    %20 = vector.broadcast %cst_18 : f32 to vector<16x128xf32>
    %21 = arith.minimumf %17, %20 : vector<16x128xf32>
    %22 = math.exp %21 : vector<16x128xf32>
    %cst_19 = arith.constant 1.000000e+00 : f32
    %23 = vector.broadcast %cst_19 : f32 to vector<16x128xf32>
    %24 = arith.subf %22, %23 : vector<16x128xf32>
    %25 = arith.select %19, %17, %24 : vector<16x128xi1>, vector<16x128xf32>
    %c0_20 = arith.constant 0 : index
    %c0_21 = arith.constant 0 : index
    %26 = vector.load %arg7[%c0_20, %c0_21] : memref<128x128xf32, #tpu.memory_space<vmem>>, vector<128x128xf32>
    %cst_22 = arith.constant dense<0.000000e+00> : vector<16x128xf32>
    %27 = tpu.matmul %25, %26, %cst_22 {dimension_numbers = #tpu.dot_dimension_numbers<[1], [0], [0], [1], [0, 0, 1, 1], [], []>} : vector<16x128xf32>, vector<128x128xf32>, vector<16x128xf32> -> vector<16x128xf32>
    %c0_23 = arith.constant 0 : index
    %c0_24 = arith.constant 0 : index
    %28 = vector.load %arg8[%c0_23, %c0_24] : memref<1x128xf32, #tpu.memory_space<vmem>>, vector<1x128xf32>
    %29 = vector.broadcast %28 : vector<1x128xf32> to vector<16x128xf32>
    %30 = arith.addf %27, %29 : vector<16x128xf32>
    %cst_25 = arith.constant 0.000000e+00 : f32
    %31 = vector.broadcast %cst_25 : f32 to vector<16x128xf32>
    %32 = arith.cmpf ogt, %30, %31 : vector<16x128xf32>
    %cst_26 = arith.constant 0.000000e+00 : f32
    %33 = vector.broadcast %cst_26 : f32 to vector<16x128xf32>
    %34 = arith.minimumf %30, %33 : vector<16x128xf32>
    %35 = math.exp %34 : vector<16x128xf32>
    %cst_27 = arith.constant 1.000000e+00 : f32
    %36 = vector.broadcast %cst_27 : f32 to vector<16x128xf32>
    %37 = arith.subf %35, %36 : vector<16x128xf32>
    %38 = arith.select %32, %30, %37 : vector<16x128xi1>, vector<16x128xf32>
    %c0_28 = arith.constant 0 : index
    %c0_29 = arith.constant 0 : index
    %39 = vector.load %arg9[%c0_28, %c0_29] : memref<128x32xf32, #tpu.memory_space<vmem>>, vector<128x32xf32>
    %cst_30 = arith.constant dense<0.000000e+00> : vector<16x32xf32>
    %40 = tpu.matmul %38, %39, %cst_30 {dimension_numbers = #tpu.dot_dimension_numbers<[1], [0], [0], [1], [0, 0, 1, 1], [], []>} : vector<16x128xf32>, vector<128x32xf32>, vector<16x32xf32> -> vector<16x32xf32>
    %c0_31 = arith.constant 0 : index
    %c0_32 = arith.constant 0 : index
    %41 = vector.load %arg10[%c0_31, %c0_32] : memref<1x32xf32, #tpu.memory_space<vmem>>, vector<1x32xf32>
    %42 = vector.broadcast %41 : vector<1x32xf32> to vector<16x32xf32>
    %43 = arith.addf %40, %42 : vector<16x32xf32>
    %cst_33 = arith.constant 0.000000e+00 : f32
    %44 = vector.broadcast %cst_33 : f32 to vector<16x32xf32>
    %45 = arith.cmpf ogt, %43, %44 : vector<16x32xf32>
    %cst_34 = arith.constant 0.000000e+00 : f32
    %46 = vector.broadcast %cst_34 : f32 to vector<16x32xf32>
    %47 = arith.minimumf %43, %46 : vector<16x32xf32>
    %48 = math.exp %47 : vector<16x32xf32>
    %cst_35 = arith.constant 1.000000e+00 : f32
    %49 = vector.broadcast %cst_35 : f32 to vector<16x32xf32>
    %50 = arith.subf %48, %49 : vector<16x32xf32>
    %51 = arith.select %45, %43, %50 : vector<16x32xi1>, vector<16x32xf32>
    %c0_36 = arith.constant 0 : index
    %c0_37 = arith.constant 0 : index
    %52 = vector.load %arg11[%c0_36, %c0_37] : memref<32x32xf32, #tpu.memory_space<vmem>>, vector<32x32xf32>
    %cst_38 = arith.constant dense<0.000000e+00> : vector<16x32xf32>
    %53 = tpu.matmul %51, %52, %cst_38 {dimension_numbers = #tpu.dot_dimension_numbers<[1], [0], [0], [1], [0, 0, 1, 1], [], []>} : vector<16x32xf32>, vector<32x32xf32>, vector<16x32xf32> -> vector<16x32xf32>
    %c0_39 = arith.constant 0 : index
    %c0_40 = arith.constant 0 : index
    %54 = vector.load %arg12[%c0_39, %c0_40] : memref<1x32xf32, #tpu.memory_space<vmem>>, vector<1x32xf32>
    %55 = vector.broadcast %54 : vector<1x32xf32> to vector<16x32xf32>
    %56 = arith.addf %53, %55 : vector<16x32xf32>
    %cst_41 = arith.constant 0.000000e+00 : f32
    %57 = vector.broadcast %cst_41 : f32 to vector<16x32xf32>
    %58 = arith.cmpf ogt, %56, %57 : vector<16x32xf32>
    %cst_42 = arith.constant 0.000000e+00 : f32
    %59 = vector.broadcast %cst_42 : f32 to vector<16x32xf32>
    %60 = arith.minimumf %56, %59 : vector<16x32xf32>
    %61 = math.exp %60 : vector<16x32xf32>
    %cst_43 = arith.constant 1.000000e+00 : f32
    %62 = vector.broadcast %cst_43 : f32 to vector<16x32xf32>
    %63 = arith.subf %61, %62 : vector<16x32xf32>
    %64 = arith.select %58, %56, %63 : vector<16x32xi1>, vector<16x32xf32>
    %c0_44 = arith.constant 0 : index
    %c0_45 = arith.constant 0 : index
    %65 = vector.load %arg13[%c0_44, %c0_45] : memref<32x32xf32, #tpu.memory_space<vmem>>, vector<32x32xf32>
    %cst_46 = arith.constant dense<0.000000e+00> : vector<16x32xf32>
    %66 = tpu.matmul %64, %65, %cst_46 {dimension_numbers = #tpu.dot_dimension_numbers<[1], [0], [0], [1], [0, 0, 1, 1], [], []>} : vector<16x32xf32>, vector<32x32xf32>, vector<16x32xf32> -> vector<16x32xf32>
    %c0_47 = arith.constant 0 : index
    %c0_48 = arith.constant 0 : index
    %67 = vector.load %arg14[%c0_47, %c0_48] : memref<1x32xf32, #tpu.memory_space<vmem>>, vector<1x32xf32>
    %68 = vector.broadcast %67 : vector<1x32xf32> to vector<16x32xf32>
    %69 = arith.addf %66, %68 : vector<16x32xf32>
    %cst_49 = arith.constant 0.000000e+00 : f32
    %70 = vector.broadcast %cst_49 : f32 to vector<16x32xf32>
    %71 = arith.cmpf ogt, %69, %70 : vector<16x32xf32>
    %cst_50 = arith.constant 0.000000e+00 : f32
    %72 = vector.broadcast %cst_50 : f32 to vector<16x32xf32>
    %73 = arith.minimumf %69, %72 : vector<16x32xf32>
    %74 = math.exp %73 : vector<16x32xf32>
    %cst_51 = arith.constant 1.000000e+00 : f32
    %75 = vector.broadcast %cst_51 : f32 to vector<16x32xf32>
    %76 = arith.subf %74, %75 : vector<16x32xf32>
    %77 = arith.select %71, %69, %76 : vector<16x32xi1>, vector<16x32xf32>
    %c0_52 = arith.constant 0 : index
    %c0_53 = arith.constant 0 : index
    %78 = vector.load %arg15[%c0_52, %c0_53] : memref<32x8xf32, #tpu.memory_space<vmem>>, vector<32x8xf32>
    %cst_54 = arith.constant dense<0.000000e+00> : vector<16x8xf32>
    %79 = tpu.matmul %77, %78, %cst_54 {dimension_numbers = #tpu.dot_dimension_numbers<[1], [0], [0], [1], [0, 0, 1, 1], [], []>} : vector<16x32xf32>, vector<32x8xf32>, vector<16x8xf32> -> vector<16x8xf32>
    %c0_55 = arith.constant 0 : index
    %c0_56 = arith.constant 0 : index
    %80 = vector.load %arg16[%c0_55, %c0_56] : memref<1x8xf32, #tpu.memory_space<vmem>>, vector<1x8xf32>
    %81 = vector.broadcast %80 : vector<1x8xf32> to vector<16x8xf32>
    %82 = arith.addf %79, %81 : vector<16x8xf32>
    %83 = vector.shape_cast %82 : vector<16x8xf32> to vector<2x8x8xf32>
    %84 = vector.extract_strided_slice %83 {offsets = [0, 0, 0], sizes = [2, 1, 8], strides = [1, 1, 1]} : vector<2x8x8xf32> to vector<2x1x8xf32>
    %85 = vector.shape_cast %84 : vector<2x1x8xf32> to vector<2x8xf32>
    %c0_57 = arith.constant 0 : index
    %c0_58 = arith.constant 0 : index
    %86 = vector.load %arg17[%c0_57, %c0_58] : memref<2x64xf32, #tpu.memory_space<vmem>>, vector<2x8xf32>
    tpu.vector_store %arg17[%c0_57, %c0_58], %85 {strides = array<i32>} : memref<2x64xf32, #tpu.memory_space<vmem>>, vector<2x8xf32>,
    %87 = vector.extract_strided_slice %83 {offsets = [0, 1, 0], sizes = [2, 1, 8], strides = [1, 1, 1]} : vector<2x8x8xf32> to vector<2x1x8xf32>
    %88 = vector.shape_cast %87 : vector<2x1x8xf32> to vector<2x8xf32>
    %c0_59 = arith.constant 0 : index
    %c8 = arith.constant 8 : index
    %89 = vector.load %arg17[%c0_59, %c8] : memref<2x64xf32, #tpu.memory_space<vmem>>, vector<2x8xf32>
    tpu.vector_store %arg17[%c0_59, %c8], %88 {strides = array<i32>} : memref<2x64xf32, #tpu.memory_space<vmem>>, vector<2x8xf32>,
    %90 = vector.extract_strided_slice %83 {offsets = [0, 2, 0], sizes = [2, 1, 8], strides = [1, 1, 1]} : vector<2x8x8xf32> to vector<2x1x8xf32>
    %91 = vector.shape_cast %90 : vector<2x1x8xf32> to vector<2x8xf32>
    %c0_60 = arith.constant 0 : index
    %c16 = arith.constant 16 : index
    %92 = vector.load %arg17[%c0_60, %c16] : memref<2x64xf32, #tpu.memory_space<vmem>>, vector<2x8xf32>
    tpu.vector_store %arg17[%c0_60, %c16], %91 {strides = array<i32>} : memref<2x64xf32, #tpu.memory_space<vmem>>, vector<2x8xf32>,
    %93 = vector.extract_strided_slice %83 {offsets = [0, 3, 0], sizes = [2, 1, 8], strides = [1, 1, 1]} : vector<2x8x8xf32> to vector<2x1x8xf32>
    %94 = vector.shape_cast %93 : vector<2x1x8xf32> to vector<2x8xf32>
    %c0_61 = arith.constant 0 : index
    %c24 = arith.constant 24 : index
    %95 = vector.load %arg17[%c0_61, %c24] : memref<2x64xf32, #tpu.memory_space<vmem>>, vector<2x8xf32>
    tpu.vector_store %arg17[%c0_61, %c24], %94 {strides = array<i32>} : memref<2x64xf32, #tpu.memory_space<vmem>>, vector<2x8xf32>,
    %96 = vector.extract_strided_slice %83 {offsets = [0, 4, 0], sizes = [2, 1, 8], strides = [1, 1, 1]} : vector<2x8x8xf32> to vector<2x1x8xf32>
    %97 = vector.shape_cast %96 : vector<2x1x8xf32> to vector<2x8xf32>
    %c0_62 = arith.constant 0 : index
    %c32 = arith.constant 32 : index
    %98 = vector.load %arg17[%c0_62, %c32] : memref<2x64xf32, #tpu.memory_space<vmem>>, vector<2x8xf32>
    tpu.vector_store %arg17[%c0_62, %c32], %97 {strides = array<i32>} : memref<2x64xf32, #tpu.memory_space<vmem>>, vector<2x8xf32>,
    %99 = vector.extract_strided_slice %83 {offsets = [0, 5, 0], sizes = [2, 1, 8], strides = [1, 1, 1]} : vector<2x8x8xf32> to vector<2x1x8xf32>
    %100 = vector.shape_cast %99 : vector<2x1x8xf32> to vector<2x8xf32>
    %c0_63 = arith.constant 0 : index
    %c40 = arith.constant 40 : index
    %101 = vector.load %arg17[%c0_63, %c40] : memref<2x64xf32, #tpu.memory_space<vmem>>, vector<2x8xf32>
    tpu.vector_store %arg17[%c0_63, %c40], %100 {strides = array<i32>} : memref<2x64xf32, #tpu.memory_space<vmem>>, vector<2x8xf32>,
    %102 = vector.extract_strided_slice %83 {offsets = [0, 6, 0], sizes = [2, 1, 8], strides = [1, 1, 1]} : vector<2x8x8xf32> to vector<2x1x8xf32>
    %103 = vector.shape_cast %102 : vector<2x1x8xf32> to vector<2x8xf32>
    %c0_64 = arith.constant 0 : index
    %c48 = arith.constant 48 : index
    %104 = vector.load %arg17[%c0_64, %c48] : memref<2x64xf32, #tpu.memory_space<vmem>>, vector<2x8xf32>
    tpu.vector_store %arg17[%c0_64, %c48], %103 {strides = array<i32>} : memref<2x64xf32, #tpu.memory_space<vmem>>, vector<2x8xf32>,
    %105 = vector.extract_strided_slice %83 {offsets = [0, 7, 0], sizes = [2, 1, 8], strides = [1, 1, 1]} : vector<2x8x8xf32> to vector<2x1x8xf32>
    %106 = vector.shape_cast %105 : vector<2x1x8xf32> to vector<2x8xf32>
    %c0_65 = arith.constant 0 : index
    %c56 = arith.constant 56 : index
    %107 = vector.load %arg17[%c0_65, %c56] : memref<2x64xf32, #tpu.memory_space<vmem>>, vector<2x8xf32>
    tpu.vector_store %arg17[%c0_65, %c56], %106 {strides = array<i32>} : memref<2x64xf32, #tpu.memory_space<vmem>>, vector<2x8xf32>,
    return
  }
  func.func @transform_0(%arg0: i32) -> (i32, i32, i32) {
    %c0_i32 = arith.constant 0 : i32
    %c0_i32_0 = arith.constant 0 : i32
    %c0_i32_1 = arith.constant 0 : i32
    return %arg0, %c0_i32, %c0_i32_0 : i32, i32, i32
  }
  func.func @transform_1(%arg0: i32) -> (i32, i32, i32) {
    %c0_i32 = arith.constant 0 : i32
    %c0_i32_0 = arith.constant 0 : i32
    %c0_i32_1 = arith.constant 0 : i32
    return %arg0, %c0_i32, %c0_i32_0 : i32, i32, i32
  }
  func.func @transform_2(%arg0: i32) -> (i32, i32, i32) {
    %c0_i32 = arith.constant 0 : i32
    %c0_i32_0 = arith.constant 0 : i32
    %c0_i32_1 = arith.constant 0 : i32
    return %arg0, %c0_i32, %c0_i32_0 : i32, i32, i32
  }
  func.func @transform_3(%arg0: i32) -> (i32, i32, i32) {
    %c0_i32 = arith.constant 0 : i32
    %c0_i32_0 = arith.constant 0 : i32
    %c0_i32_1 = arith.constant 0 : i32
    return %arg0, %c0_i32, %c0_i32_0 : i32, i32, i32
  }
  func.func @transform_4(%arg0: i32) -> (i32, i32) {
    %c0_i32 = arith.constant 0 : i32
    %c0_i32_0 = arith.constant 0 : i32
    %c0_i32_1 = arith.constant 0 : i32
    return %c0_i32, %c0_i32_0 : i32, i32
  }
  func.func @transform_5(%arg0: i32) -> (i32, i32) {
    %c0_i32 = arith.constant 0 : i32
    %c0_i32_0 = arith.constant 0 : i32
    %c0_i32_1 = arith.constant 0 : i32
    return %c0_i32, %c0_i32_0 : i32, i32
  }
  func.func @transform_6(%arg0: i32) -> (i32, i32) {
    %c0_i32 = arith.constant 0 : i32
    %c0_i32_0 = arith.constant 0 : i32
    %c0_i32_1 = arith.constant 0 : i32
    return %c0_i32, %c0_i32_0 : i32, i32
  }
  func.func @transform_7(%arg0: i32) -> (i32, i32) {
    %c0_i32 = arith.constant 0 : i32
    %c0_i32_0 = arith.constant 0 : i32
    %c0_i32_1 = arith.constant 0 : i32
    return %c0_i32, %c0_i32_0 : i32, i32
  }
  func.func @transform_8(%arg0: i32) -> (i32, i32) {
    %c0_i32 = arith.constant 0 : i32
    %c0_i32_0 = arith.constant 0 : i32
    %c0_i32_1 = arith.constant 0 : i32
    return %c0_i32, %c0_i32_0 : i32, i32
  }
  func.func @transform_9(%arg0: i32) -> (i32, i32) {
    %c0_i32 = arith.constant 0 : i32
    %c0_i32_0 = arith.constant 0 : i32
    %c0_i32_1 = arith.constant 0 : i32
    return %c0_i32, %c0_i32_0 : i32, i32
  }
  func.func @transform_10(%arg0: i32) -> (i32, i32) {
    %c0_i32 = arith.constant 0 : i32
    %c0_i32_0 = arith.constant 0 : i32
    %c0_i32_1 = arith.constant 0 : i32
    return %c0_i32, %c0_i32_0 : i32, i32
  }
  func.func @transform_11(%arg0: i32) -> (i32, i32) {
    %c0_i32 = arith.constant 0 : i32
    %c0_i32_0 = arith.constant 0 : i32
    %c0_i32_1 = arith.constant 0 : i32
    return %c0_i32, %c0_i32_0 : i32, i32
  }
  func.func @transform_12(%arg0: i32) -> (i32, i32) {
    %c0_i32 = arith.constant 0 : i32
    %c0_i32_0 = arith.constant 0 : i32
    %c0_i32_1 = arith.constant 0 : i32
    return %c0_i32, %c0_i32_0 : i32, i32
  }
  func.func @transform_13(%arg0: i32) -> (i32, i32) {
    %c0_i32 = arith.constant 0 : i32
    %c0_i32_0 = arith.constant 0 : i32
    %c0_i32_1 = arith.constant 0 : i32
    return %c0_i32, %c0_i32_0 : i32, i32
  }
  func.func @transform_14(%arg0: i32) -> (i32, i32) {
    %c0_i32 = arith.constant 0 : i32
    %c0_i32_0 = arith.constant 0 : i32
    %c0_i32_1 = arith.constant 0 : i32
    return %c0_i32, %c0_i32_0 : i32, i32
  }
  func.func @transform_15(%arg0: i32) -> (i32, i32) {
    %c0_i32 = arith.constant 0 : i32
    %c0_i32_0 = arith.constant 0 : i32
    %c0_i32_1 = arith.constant 0 : i32
    return %c0_i32, %c0_i32_0 : i32, i32
  }
  func.func @transform_16(%arg0: i32) -> (i32, i32) {
    %c0_i32 = arith.constant 0 : i32
    %c0_i32_0 = arith.constant 0 : i32
    return %arg0, %c0_i32 : i32, i32
  }
}

module attributes {stable_mosaic.version = 11 : i64} {
  func.func @mlps_kernel(%arg0: i32, %arg1: memref<2x8x4xbf16, #tpu.memory_space<vmem>>, %arg2: memref<2x16x8xbf16, #tpu.memory_space<vmem>>, %arg3: memref<2x8x6xf32, #tpu.memory_space<vmem>>, %arg4: memref<2x4x3xf32, #tpu.memory_space<vmem>>, %arg5: memref<21x128xf32, #tpu.memory_space<vmem>>, %arg6: memref<1x128xf32, #tpu.memory_space<vmem>>, %arg7: memref<128x128xf32, #tpu.memory_space<vmem>>, %arg8: memref<1x128xf32, #tpu.memory_space<vmem>>, %arg9: memref<128x32xf32, #tpu.memory_space<vmem>>, %arg10: memref<1x32xf32, #tpu.memory_space<vmem>>, %arg11: memref<32x32xf32, #tpu.memory_space<vmem>>, %arg12: memref<1x32xf32, #tpu.memory_space<vmem>>, %arg13: memref<32x32xf32, #tpu.memory_space<vmem>>, %arg14: memref<1x32xf32, #tpu.memory_space<vmem>>, %arg15: memref<32x8xf32, #tpu.memory_space<vmem>>, %arg16: memref<1x8xf32, #tpu.memory_space<vmem>>, %arg17: memref<2x64xf32, #tpu.memory_space<vmem>>) attributes {dimension_semantics = [#tpu.dimension_semantics<parallel>], iteration_bounds = array<i64: 1>, scalar_prefetch = 0 : i64, scratch_operands = 0 : i64, tpu.core_type = #tpu.core_type<tc>, window_params = [{transform_indices = @transform_0, window_bounds = array<i64: 2, 8, 4>}, {transform_indices = @transform_1, window_bounds = array<i64: 2, 16, 8>}, {transform_indices = @transform_2, window_bounds = array<i64: 2, 8, 6>}, {transform_indices = @transform_3, window_bounds = array<i64: 2, 4, 3>}, {pipeline_mode = #tpu.pipeline_mode<synchronous>, transform_indices = @transform_4, window_bounds = array<i64: 21, 128>}, {pipeline_mode = #tpu.pipeline_mode<synchronous>, transform_indices = @transform_5, window_bounds = array<i64: 1, 128>}, {pipeline_mode = #tpu.pipeline_mode<synchronous>, transform_indices = @transform_6, window_bounds = array<i64: 128, 128>}, {pipeline_mode = #tpu.pipeline_mode<synchronous>, transform_indices = @transform_7, window_bounds = array<i64: 1, 128>}, {pipeline_mode = #tpu.pipeline_mode<synchronous>, transform_indices = @transform_8, window_bounds = array<i64: 128, 32>}, {pipeline_mode = #tpu.pipeline_mode<synchronous>, transform_indices = @transform_9, window_bounds = array<i64: 1, 32>}, {pipeline_mode = #tpu.pipeline_mode<synchronous>, transform_indices = @transform_10, window_bounds = array<i64: 32, 32>}, {pipeline_mode = #tpu.pipeline_mode<synchronous>, transform_indices = @transform_11, window_bounds = array<i64: 1, 32>}, {pipeline_mode = #tpu.pipeline_mode<synchronous>, transform_indices = @transform_12, window_bounds = array<i64: 32, 32>}, {pipeline_mode = #tpu.pipeline_mode<synchronous>, transform_indices = @transform_13, window_bounds = array<i64: 1, 32>}, {pipeline_mode = #tpu.pipeline_mode<synchronous>, transform_indices = @transform_14, window_bounds = array<i64: 32, 8>}, {pipeline_mode = #tpu.pipeline_mode<synchronous>, transform_indices = @transform_15, window_bounds = array<i64: 1, 8>}, {transform_indices = @transform_16, window_bounds = array<i64: 2, 64>}]} {
    %c0 = arith.constant 0 : index
    %c0_0 = arith.constant 0 : index
    %c0_1 = arith.constant 0 : index
    %0 = vector.load %arg3[%c0, %c0_0, %c0_1] : memref<2x8x6xf32, #tpu.memory_space<vmem>>, vector<2x8x6xf32>
    %c0_2 = arith.constant 0 : index
    %c0_3 = arith.constant 0 : index
    %c0_4 = arith.constant 0 : index
    %1 = vector.load %arg4[%c0_2, %c0_3, %c0_4] : memref<2x4x3xf32, #tpu.memory_space<vmem>>, vector<2x4x3xf32>
    %c0_5 = arith.constant 0 : index
    %c0_6 = arith.constant 0 : index
    %c0_7 = arith.constant 0 : index
    %2 = vector.load %arg1[%c0_5, %c0_6, %c0_7] : memref<2x8x4xbf16, #tpu.memory_space<vmem>>, vector<2x8x4xbf16>
    "tpu.trace_start"() <{level = 10 : i32, message = "bnm,bmd->bnd"}> : () -> ()
    %cst = arith.constant dense<0.000000e+00> : vector<2x8x3xf32>
    %3 = tpu.matmul %2, %1, %cst {dimension_numbers = #tpu.dot_dimension_numbers<[2], [1], [1], [2], [0, 0, 0, 1, 1, 2], [0], [0]>} : vector<2x8x4xbf16>, vector<2x4x3xf32>, vector<2x8x3xf32> -> vector<2x8x3xf32>
    "tpu.trace_stop"() : () -> ()
    %c0_8 = arith.constant 0 : index
    %c0_9 = arith.constant 0 : index
    %c0_10 = arith.constant 0 : index
    %4 = vector.load %arg2[%c0_8, %c0_9, %c0_10] : memref<2x16x8xbf16, #tpu.memory_space<vmem>>, vector<2x16x8xbf16>
    "tpu.trace_start"() <{level = 10 : i32, message = "bnm,bmd->bnd"}> : () -> ()
    %cst_11 = arith.constant dense<0.000000e+00> : vector<2x16x6xf32>
    %5 = tpu.matmul %4, %0, %cst_11 {dimension_numbers = #tpu.dot_dimension_numbers<[2], [1], [1], [2], [0, 0, 0, 1, 1, 2], [0], [0]>} : vector<2x16x8xbf16>, vector<2x8x6xf32>, vector<2x16x6xf32> -> vector<2x16x6xf32>
    "tpu.trace_stop"() : () -> ()
    %6 = vector.shape_cast %3 : vector<2x8x3xf32> to vector<16x3xf32>
    %7 = vector.extract_strided_slice %5 {offsets = [0, 0, 0], sizes = [2, 8, 6], strides = [1, 1, 1]} : vector<2x16x6xf32> to vector<2x8x6xf32>
    %8 = vector.shape_cast %7 : vector<2x8x6xf32> to vector<16x6xf32>
    %9 = vector.extract_strided_slice %5 {offsets = [0, 8, 0], sizes = [2, 8, 6], strides = [1, 1, 1]} : vector<2x16x6xf32> to vector<2x8x6xf32>
    %10 = vector.shape_cast %9 : vector<2x8x6xf32> to vector<16x6xf32>
    %11 = vector.shape_cast %0 : vector<2x8x6xf32> to vector<16x6xf32>
    %12 = tpu.concatenate %6, %8, %10, %11 in 1 : vector<16x3xf32>, vector<16x6xf32>, vector<16x6xf32>, vector<16x6xf32> -> vector<16x21xf32>
    %c0_12 = arith.constant 0 : index
    %c0_13 = arith.constant 0 : index
    %13 = vector.load %arg5[%c0_12, %c0_13] : memref<21x128xf32, #tpu.memory_space<vmem>>, vector<21x128xf32>
    %cst_14 = arith.constant dense<0.000000e+00> : vector<16x128xf32>
    %14 = tpu.matmul %12, %13, %cst_14 {dimension_numbers = #tpu.dot_dimension_numbers<[1], [0], [0], [1], [0, 0, 1, 1], [], []>} : vector<16x21xf32>, vector<21x128xf32>, vector<16x128xf32> -> vector<16x128xf32>
    %c0_15 = arith.constant 0 : index
    %c0_16 = arith.constant 0 : index
    %15 = vector.load %arg6[%c0_15, %c0_16] : memref<1x128xf32, #tpu.memory_space<vmem>>, vector<1x128xf32>
    %16 = vector.broadcast %15 : vector<1x128xf32> to vector<16x128xf32>
    %17 = arith.addf %14, %16 : vector<16x128xf32>
    %cst_17 = arith.constant 0.000000e+00 : f32
    %18 = vector.broadcast %cst_17 : f32 to vector<16x128xf32>
    %19 = arith.cmpf ogt, %17, %18 : vector<16x128xf32>
    %cst_18 = arith.constant 0.000000e+00 : f32
    %20 = vector.broadcast %cst_18 : f32 to vector<16x128xf32>
    %21 = arith.minimumf %17, %20 : vector<16x128xf32>
    %22 = math.exp %21 : vector<16x128xf32>
    %cst_19 = arith.constant 1.000000e+00 : f32
    %23 = vector.broadcast %cst_19 : f32 to vector<16x128xf32>
    %24 = arith.subf %22, %23 : vector<16x128xf32>
    %25 = arith.select %19, %17, %24 : vector<16x128xi1>, vector<16x128xf32>
    %c0_20 = arith.constant 0 : index
    %c0_21 = arith.constant 0 : index
    %26 = vector.load %arg7[%c0_20, %c0_21] : memref<128x128xf32, #tpu.memory_space<vmem>>, vector<128x128xf32>
    %cst_22 = arith.constant dense<0.000000e+00> : vector<16x128xf32>
    %27 = tpu.matmul %25, %26, %cst_22 {dimension_numbers = #tpu.dot_dimension_numbers<[1], [0], [0], [1], [0, 0, 1, 1], [], []>} : vector<16x128xf32>, vector<128x128xf32>, vector<16x128xf32> -> vector<16x128xf32>
    %c0_23 = arith.constant 0 : index
    %c0_24 = arith.constant 0 : index
    %28 = vector.load %arg8[%c0_23, %c0_24] : memref<1x128xf32, #tpu.memory_space<vmem>>, vector<1x128xf32>
    %29 = vector.broadcast %28 : vector<1x128xf32> to vector<16x128xf32>
    %30 = arith.addf %27, %29 : vector<16x128xf32>
    %cst_25 = arith.constant 0.000000e+00 : f32
    %31 = vector.broadcast %cst_25 : f32 to vector<16x128xf32>
    %32 = arith.cmpf ogt, %30, %31 : vector<16x128xf32>
    %cst_26 = arith.constant 0.000000e+00 : f32
    %33 = vector.broadcast %cst_26 : f32 to vector<16x128xf32>
    %34 = arith.minimumf %30, %33 : vector<16x128xf32>
    %35 = math.exp %34 : vector<16x128xf32>
    %cst_27 = arith.constant 1.000000e+00 : f32
    %36 = vector.broadcast %cst_27 : f32 to vector<16x128xf32>
    %37 = arith.subf %35, %36 : vector<16x128xf32>
    %38 = arith.select %32, %30, %37 : vector<16x128xi1>, vector<16x128xf32>
    %c0_28 = arith.constant 0 : index
    %c0_29 = arith.constant 0 : index
    %39 = vector.load %arg9[%c0_28, %c0_29] : memref<128x32xf32, #tpu.memory_space<vmem>>, vector<128x32xf32>
    %cst_30 = arith.constant dense<0.000000e+00> : vector<16x32xf32>
    %40 = tpu.matmul %38, %39, %cst_30 {dimension_numbers = #tpu.dot_dimension_numbers<[1], [0], [0], [1], [0, 0, 1, 1], [], []>} : vector<16x128xf32>, vector<128x32xf32>, vector<16x32xf32> -> vector<16x32xf32>
    %c0_31 = arith.constant 0 : index
    %c0_32 = arith.constant 0 : index
    %41 = vector.load %arg10[%c0_31, %c0_32] : memref<1x32xf32, #tpu.memory_space<vmem>>, vector<1x32xf32>
    %42 = vector.broadcast %41 : vector<1x32xf32> to vector<16x32xf32>
    %43 = arith.addf %40, %42 : vector<16x32xf32>
    %cst_33 = arith.constant 0.000000e+00 : f32
    %44 = vector.broadcast %cst_33 : f32 to vector<16x32xf32>
    %45 = arith.cmpf ogt, %43, %44 : vector<16x32xf32>
    %cst_34 = arith.constant 0.000000e+00 : f32
    %46 = vector.broadcast %cst_34 : f32 to vector<16x32xf32>
    %47 = arith.minimumf %43, %46 : vector<16x32xf32>
    %48 = math.exp %47 : vector<16x32xf32>
    %cst_35 = arith.constant 1.000000e+00 : f32
    %49 = vector.broadcast %cst_35 : f32 to vector<16x32xf32>
    %50 = arith.subf %48, %49 : vector<16x32xf32>
    %51 = arith.select %45, %43, %50 : vector<16x32xi1>, vector<16x32xf32>
    %c0_36 = arith.constant 0 : index
    %c0_37 = arith.constant 0 : index
    %52 = vector.load %arg11[%c0_36, %c0_37] : memref<32x32xf32, #tpu.memory_space<vmem>>, vector<32x32xf32>
    %cst_38 = arith.constant dense<0.000000e+00> : vector<16x32xf32>
    %53 = tpu.matmul %51, %52, %cst_38 {dimension_numbers = #tpu.dot_dimension_numbers<[1], [0], [0], [1], [0, 0, 1, 1], [], []>} : vector<16x32xf32>, vector<32x32xf32>, vector<16x32xf32> -> vector<16x32xf32>
    %c0_39 = arith.constant 0 : index
    %c0_40 = arith.constant 0 : index
    %54 = vector.load %arg12[%c0_39, %c0_40] : memref<1x32xf32, #tpu.memory_space<vmem>>, vector<1x32xf32>
    %55 = vector.broadcast %54 : vector<1x32xf32> to vector<16x32xf32>
    %56 = arith.addf %53, %55 : vector<16x32xf32>
    %cst_41 = arith.constant 0.000000e+00 : f32
    %57 = vector.broadcast %cst_41 : f32 to vector<16x32xf32>
    %58 = arith.cmpf ogt, %56, %57 : vector<16x32xf32>
    %cst_42 = arith.constant 0.000000e+00 : f32
    %59 = vector.broadcast %cst_42 : f32 to vector<16x32xf32>
    %60 = arith.minimumf %56, %59 : vector<16x32xf32>
    %61 = math.exp %60 : vector<16x32xf32>
    %cst_43 = arith.constant 1.000000e+00 : f32
    %62 = vector.broadcast %cst_43 : f32 to vector<16x32xf32>
    %63 = arith.subf %61, %62 : vector<16x32xf32>
    %64 = arith.select %58, %56, %63 : vector<16x32xi1>, vector<16x32xf32>
    %c0_44 = arith.constant 0 : index
    %c0_45 = arith.constant 0 : index
    %65 = vector.load %arg13[%c0_44, %c0_45] : memref<32x32xf32, #tpu.memory_space<vmem>>, vector<32x32xf32>
    %cst_46 = arith.constant dense<0.000000e+00> : vector<16x32xf32>
    %66 = tpu.matmul %64, %65, %cst_46 {dimension_numbers = #tpu.dot_dimension_numbers<[1], [0], [0], [1], [0, 0, 1, 1], [], []>} : vector<16x32xf32>, vector<32x32xf32>, vector<16x32xf32> -> vector<16x32xf32>
    %c0_47 = arith.constant 0 : index
    %c0_48 = arith.constant 0 : index
    %67 = vector.load %arg14[%c0_47, %c0_48] : memref<1x32xf32, #tpu.memory_space<vmem>>, vector<1x32xf32>
    %68 = vector.broadcast %67 : vector<1x32xf32> to vector<16x32xf32>
    %69 = arith.addf %66, %68 : vector<16x32xf32>
    %cst_49 = arith.constant 0.000000e+00 : f32
    %70 = vector.broadcast %cst_49 : f32 to vector<16x32xf32>
    %71 = arith.cmpf ogt, %69, %70 : vector<16x32xf32>
    %cst_50 = arith.constant 0.000000e+00 : f32
    %72 = vector.broadcast %cst_50 : f32 to vector<16x32xf32>
    %73 = arith.minimumf %69, %72 : vector<16x32xf32>
    %74 = math.exp %73 : vector<16x32xf32>
    %cst_51 = arith.constant 1.000000e+00 : f32
    %75 = vector.broadcast %cst_51 : f32 to vector<16x32xf32>
    %76 = arith.subf %74, %75 : vector<16x32xf32>
    %77 = arith.select %71, %69, %76 : vector<16x32xi1>, vector<16x32xf32>
    %c0_52 = arith.constant 0 : index
    %c0_53 = arith.constant 0 : index
    %78 = vector.load %arg15[%c0_52, %c0_53] : memref<32x8xf32, #tpu.memory_space<vmem>>, vector<32x8xf32>
    %cst_54 = arith.constant dense<0.000000e+00> : vector<16x8xf32>
    %79 = tpu.matmul %77, %78, %cst_54 {dimension_numbers = #tpu.dot_dimension_numbers<[1], [0], [0], [1], [0, 0, 1, 1], [], []>} : vector<16x32xf32>, vector<32x8xf32>, vector<16x8xf32> -> vector<16x8xf32>
    %c0_55 = arith.constant 0 : index
    %c0_56 = arith.constant 0 : index
    %80 = vector.load %arg16[%c0_55, %c0_56] : memref<1x8xf32, #tpu.memory_space<vmem>>, vector<1x8xf32>
    %81 = vector.broadcast %80 : vector<1x8xf32> to vector<16x8xf32>
    %82 = arith.addf %79, %81 : vector<16x8xf32>
    %83 = vector.shape_cast %82 : vector<16x8xf32> to vector<2x8x8xf32>
    %84 = vector.extract_strided_slice %83 {offsets = [0, 0, 0], sizes = [2, 1, 8], strides = [1, 1, 1]} : vector<2x8x8xf32> to vector<2x1x8xf32>
    %85 = vector.shape_cast %84 : vector<2x1x8xf32> to vector<2x8xf32>
    %c0_57 = arith.constant 0 : index
    %c0_58 = arith.constant 0 : index
    %86 = vector.load %arg17[%c0_57, %c0_58] : memref<2x64xf32, #tpu.memory_space<vmem>>, vector<2x8xf32>
    tpu.vector_store %arg17[%c0_57, %c0_58], %85 {strides = array<i32>} : memref<2x64xf32, #tpu.memory_space<vmem>>, vector<2x8xf32>,
    %87 = vector.extract_strided_slice %83 {offsets = [0, 1, 0], sizes = [2, 1, 8], strides = [1, 1, 1]} : vector<2x8x8xf32> to vector<2x1x8xf32>
    %88 = vector.shape_cast %87 : vector<2x1x8xf32> to vector<2x8xf32>
    %c0_59 = arith.constant 0 : index
    %c8 = arith.constant 8 : index
    %89 = vector.load %arg17[%c0_59, %c8] : memref<2x64xf32, #tpu.memory_space<vmem>>, vector<2x8xf32>
    tpu.vector_store %arg17[%c0_59, %c8], %88 {strides = array<i32>} : memref<2x64xf32, #tpu.memory_space<vmem>>, vector<2x8xf32>,
    %90 = vector.extract_strided_slice %83 {offsets = [0, 2, 0], sizes = [2, 1, 8], strides = [1, 1, 1]} : vector<2x8x8xf32> to vector<2x1x8xf32>
    %91 = vector.shape_cast %90 : vector<2x1x8xf32> to vector<2x8xf32>
    %c0_60 = arith.constant 0 : index
    %c16 = arith.constant 16 : index
    %92 = vector.load %arg17[%c0_60, %c16] : memref<2x64xf32, #tpu.memory_space<vmem>>, vector<2x8xf32>
    tpu.vector_store %arg17[%c0_60, %c16], %91 {strides = array<i32>} : memref<2x64xf32, #tpu.memory_space<vmem>>, vector<2x8xf32>,
    %93 = vector.extract_strided_slice %83 {offsets = [0, 3, 0], sizes = [2, 1, 8], strides = [1, 1, 1]} : vector<2x8x8xf32> to vector<2x1x8xf32>
    %94 = vector.shape_cast %93 : vector<2x1x8xf32> to vector<2x8xf32>
    %c0_61 = arith.constant 0 : index
    %c24 = arith.constant 24 : index
    %95 = vector.load %arg17[%c0_61, %c24] : memref<2x64xf32, #tpu.memory_space<vmem>>, vector<2x8xf32>
    tpu.vector_store %arg17[%c0_61, %c24], %94 {strides = array<i32>} : memref<2x64xf32, #tpu.memory_space<vmem>>, vector<2x8xf32>,
    %96 = vector.extract_strided_slice %83 {offsets = [0, 4, 0], sizes = [2, 1, 8], strides = [1, 1, 1]} : vector<2x8x8xf32> to vector<2x1x8xf32>
    %97 = vector.shape_cast %96 : vector<2x1x8xf32> to vector<2x8xf32>
    %c0_62 = arith.constant 0 : index
    %c32 = arith.constant 32 : index
    %98 = vector.load %arg17[%c0_62, %c32] : memref<2x64xf32, #tpu.memory_space<vmem>>, vector<2x8xf32>
    tpu.vector_store %arg17[%c0_62, %c32], %97 {strides = array<i32>} : memref<2x64xf32, #tpu.memory_space<vmem>>, vector<2x8xf32>,
    %99 = vector.extract_strided_slice %83 {offsets = [0, 5, 0], sizes = [2, 1, 8], strides = [1, 1, 1]} : vector<2x8x8xf32> to vector<2x1x8xf32>
    %100 = vector.shape_cast %99 : vector<2x1x8xf32> to vector<2x8xf32>
    %c0_63 = arith.constant 0 : index
    %c40 = arith.constant 40 : index
    %101 = vector.load %arg17[%c0_63, %c40] : memref<2x64xf32, #tpu.memory_space<vmem>>, vector<2x8xf32>
    tpu.vector_store %arg17[%c0_63, %c40], %100 {strides = array<i32>} : memref<2x64xf32, #tpu.memory_space<vmem>>, vector<2x8xf32>,
    %102 = vector.extract_strided_slice %83 {offsets = [0, 6, 0], sizes = [2, 1, 8], strides = [1, 1, 1]} : vector<2x8x8xf32> to vector<2x1x8xf32>
    %103 = vector.shape_cast %102 : vector<2x1x8xf32> to vector<2x8xf32>
    %c0_64 = arith.constant 0 : index
    %c48 = arith.constant 48 : index
    %104 = vector.load %arg17[%c0_64, %c48] : memref<2x64xf32, #tpu.memory_space<vmem>>, vector<2x8xf32>
    tpu.vector_store %arg17[%c0_64, %c48], %103 {strides = array<i32>} : memref<2x64xf32, #tpu.memory_space<vmem>>, vector<2x8xf32>,
    %105 = vector.extract_strided_slice %83 {offsets = [0, 7, 0], sizes = [2, 1, 8], strides = [1, 1, 1]} : vector<2x8x8xf32> to vector<2x1x8xf32>
    %106 = vector.shape_cast %105 : vector<2x1x8xf32> to vector<2x8xf32>
    %c0_65 = arith.constant 0 : index
    %c56 = arith.constant 56 : index
    %107 = vector.load %arg17[%c0_65, %c56] : memref<2x64xf32, #tpu.memory_space<vmem>>, vector<2x8xf32>
    tpu.vector_store %arg17[%c0_65, %c56], %106 {strides = array<i32>} : memref<2x64xf32, #tpu.memory_space<vmem>>, vector<2x8xf32>,
    return
  }
  func.func @transform_0(%arg0: i32) -> (i32, i32, i32) {
    %c0_i32 = arith.constant 0 : i32
    %c0_i32_0 = arith.constant 0 : i32
    %c0_i32_1 = arith.constant 0 : i32
    return %arg0, %c0_i32, %c0_i32_0 : i32, i32, i32
  }
  func.func @transform_1(%arg0: i32) -> (i32, i32, i32) {
    %c0_i32 = arith.constant 0 : i32
    %c0_i32_0 = arith.constant 0 : i32
    %c0_i32_1 = arith.constant 0 : i32
    return %arg0, %c0_i32, %c0_i32_0 : i32, i32, i32
  }
  func.func @transform_2(%arg0: i32) -> (i32, i32, i32) {
    %c0_i32 = arith.constant 0 : i32
    %c0_i32_0 = arith.constant 0 : i32
    %c0_i32_1 = arith.constant 0 : i32
    return %arg0, %c0_i32, %c0_i32_0 : i32, i32, i32
  }
  func.func @transform_3(%arg0: i32) -> (i32, i32, i32) {
    %c0_i32 = arith.constant 0 : i32
    %c0_i32_0 = arith.constant 0 : i32
    %c0_i32_1 = arith.constant 0 : i32
    return %arg0, %c0_i32, %c0_i32_0 : i32, i32, i32
  }
  func.func @transform_4(%arg0: i32) -> (i32, i32) {
    %c0_i32 = arith.constant 0 : i32
    %c0_i32_0 = arith.constant 0 : i32
    %c0_i32_1 = arith.constant 0 : i32
    return %c0_i32, %c0_i32_0 : i32, i32
  }
  func.func @transform_5(%arg0: i32) -> (i32, i32) {
    %c0_i32 = arith.constant 0 : i32
    %c0_i32_0 = arith.constant 0 : i32
    %c0_i32_1 = arith.constant 0 : i32
    return %c0_i32, %c0_i32_0 : i32, i32
  }
  func.func @transform_6(%arg0: i32) -> (i32, i32) {
    %c0_i32 = arith.constant 0 : i32
    %c0_i32_0 = arith.constant 0 : i32
    %c0_i32_1 = arith.constant 0 : i32
    return %c0_i32, %c0_i32_0 : i32, i32
  }
  func.func @transform_7(%arg0: i32) -> (i32, i32) {
    %c0_i32 = arith.constant 0 : i32
    %c0_i32_0 = arith.constant 0 : i32
    %c0_i32_1 = arith.constant 0 : i32
    return %c0_i32, %c0_i32_0 : i32, i32
  }
  func.func @transform_8(%arg0: i32) -> (i32, i32) {
    %c0_i32 = arith.constant 0 : i32
    %c0_i32_0 = arith.constant 0 : i32
    %c0_i32_1 = arith.constant 0 : i32
    return %c0_i32, %c0_i32_0 : i32, i32
  }
  func.func @transform_9(%arg0: i32) -> (i32, i32) {
    %c0_i32 = arith.constant 0 : i32
    %c0_i32_0 = arith.constant 0 : i32
    %c0_i32_1 = arith.constant 0 : i32
    return %c0_i32, %c0_i32_0 : i32, i32
  }
  func.func @transform_10(%arg0: i32) -> (i32, i32) {
    %c0_i32 = arith.constant 0 : i32
    %c0_i32_0 = arith.constant 0 : i32
    %c0_i32_1 = arith.constant 0 : i32
    return %c0_i32, %c0_i32_0 : i32, i32
  }
  func.func @transform_11(%arg0: i32) -> (i32, i32) {
    %c0_i32 = arith.constant 0 : i32
    %c0_i32_0 = arith.constant 0 : i32
    %c0_i32_1 = arith.constant 0 : i32
    return %c0_i32, %c0_i32_0 : i32, i32
  }
  func.func @transform_12(%arg0: i32) -> (i32, i32) {
    %c0_i32 = arith.constant 0 : i32
    %c0_i32_0 = arith.constant 0 : i32
    %c0_i32_1 = arith.constant 0 : i32
    return %c0_i32, %c0_i32_0 : i32, i32
  }
  func.func @transform_13(%arg0: i32) -> (i32, i32) {
    %c0_i32 = arith.constant 0 : i32
    %c0_i32_0 = arith.constant 0 : i32
    %c0_i32_1 = arith.constant 0 : i32
    return %c0_i32, %c0_i32_0 : i32, i32
  }
  func.func @transform_14(%arg0: i32) -> (i32, i32) {
    %c0_i32 = arith.constant 0 : i32
    %c0_i32_0 = arith.constant 0 : i32
    %c0_i32_1 = arith.constant 0 : i32
    return %c0_i32, %c0_i32_0 : i32, i32
  }
  func.func @transform_15(%arg0: i32) -> (i32, i32) {
    %c0_i32 = arith.constant 0 : i32
    %c0_i32_0 = arith.constant 0 : i32
    %c0_i32_1 = arith.constant 0 : i32
    return %c0_i32, %c0_i32_0 : i32, i32
  }
  func.func @transform_16(%arg0: i32) -> (i32, i32) {
    %c0_i32 = arith.constant 0 : i32
    %c0_i32_0 = arith.constant 0 : i32
    return %arg0, %c0_i32 : i32, i32
  }
}

</mosaic_0001>

<llo_original>
// kernel: tpu_custom_call.1
$region0: #{tpu_custom_call.1}
  #allocation0 [shape = 'u32[]', space=smem, size = 0x4, offset = 0x4, fixed_abs, tag = 'smem constant byte address 0x4 - core index']
  #allocation1 [shape = 'u32[72,128]{1,0:T(1,128)}', space=vmem, size = 0x9000, scoped, tag = 'internal scratch']
  %s0 = inlined_call_operand.vmem [shape: bf16[2,8,4], index: 0, kind: input, shape index: {}]
  %s1 = inlined_call_operand.vmem [shape: bf16[2,16,8], index: 1, kind: input, shape index: {}]
  %s2 = inlined_call_operand.vmem [shape: f32[2,8,6], index: 2, kind: input, shape index: {}]
  %s3 = inlined_call_operand.vmem [shape: f32[2,4,3], index: 3, kind: input, shape index: {}]
  %s4 = inlined_call_operand.hbm [shape: f32[21,128], index: 4, kind: input, shape index: {}]
  %s5 = inlined_call_operand.vmem [shape: f32[1,128], index: 5, kind: input, shape index: {}]
  %s6 = inlined_call_operand.vmem [shape: f32[128,128], index: 6, kind: input, shape index: {}]
  %s7 = inlined_call_operand.vmem [shape: f32[1,128], index: 7, kind: input, shape index: {}]
  %s8 = inlined_call_operand.vmem [shape: f32[128,32], index: 8, kind: input, shape index: {}]
  %s9 = inlined_call_operand.vmem [shape: f32[1,32], index: 9, kind: input, shape index: {}]
  %s10 = inlined_call_operand.vmem [shape: f32[32,32], index: 10, kind: input, shape index: {}]
  %s11 = inlined_call_operand.vmem [shape: f32[1,32], index: 11, kind: input, shape index: {}]
  %s12 = inlined_call_operand.vmem [shape: f32[32,32], index: 12, kind: input, shape index: {}]
  %s13 = inlined_call_operand.vmem [shape: f32[1,32], index: 13, kind: input, shape index: {}]
  %s14 = inlined_call_operand.vmem [shape: f32[32,8], index: 14, kind: input, shape index: {}]
  %s15 = inlined_call_operand.vmem [shape: f32[1,8], index: 15, kind: input, shape index: {}]
  %s16 = inlined_call_operand.hbm [shape: f32[2,64], index: 16, kind: output, shape index: {}]
  %s17 = sld [smem:[#allocation0]]
  $region78: #{tpu_custom_call.1} parent=0
    _
  %s19 = ssub.s32 1, %s17
  %s20 = scalar_select 0, %s19, %s17
  $region1: #{tpu_custom_call.1} parent=0
    #allocation2 [shape = 'u8[12288]{0}', space=vmem, size = 0x3000, scoped, tag = 'input window, operand 4, single buffered']
    #allocation3 [shape = 's32[1]{0}', space=sflag, size = 0x4, scoped, tag = 'scoped memory for tpu_custom_call.1']
    #allocation4 [shape = 's32[1]{0}', space=sflag, size = 0x4, scoped, tag = 'scoped memory for tpu_custom_call.1']
    #allocation5 [shape = 'u8[1024]{0}', space=vmem, size = 0x400, scoped, tag = 'output window, operand 0, single buffered']
    %21 = vsyncpa [#allocation3], 0
    %22 = vsyncpa [#allocation4], 0
    // Predicated region
    $region2: #{tpu_custom_call.1} parent=1 // pred_check
      _
    $region3: #{tpu_custom_call.1} parent=1 // pred_check_branch
      %24 = sbr.rel (0) target = $region5
    $region4: #{tpu_custom_call.1} parent=1 // pred_region
      _
    $region5: #{tpu_custom_call.1} parent=1 // pred_fallthru
      _
    // Predicated region
    $region6: #{tpu_custom_call.1} parent=1 // pred_check
      _
    $region7: #{tpu_custom_call.1} parent=1 // pred_check_branch
      %26 = sbr.rel (0) target = $region9
    $region8: #{tpu_custom_call.1} parent=1 // pred_region
      _
    $region9: #{tpu_custom_call.1} parent=1 // pred_fallthru
      _
    // Predicated region
    $region10: #{tpu_custom_call.1} parent=1 // pred_check
      _
    $region11: #{tpu_custom_call.1} parent=1 // pred_check_branch
      %28 = sbr.rel (0) target = $region13
    $region12: #{tpu_custom_call.1} parent=1 // pred_region
      _
    $region13: #{tpu_custom_call.1} parent=1 // pred_fallthru
      _
    // Predicated region
    $region14: #{tpu_custom_call.1} parent=1 // pred_check
      _
    $region15: #{tpu_custom_call.1} parent=1 // pred_check_branch
      %30 = sbr.rel (0) target = $region17
    $region16: #{tpu_custom_call.1} parent=1 // pred_region
      _
    $region17: #{tpu_custom_call.1} parent=1 // pred_fallthru
      _
    // Predicated region
    $region18: #{tpu_custom_call.1} parent=1 // pred_check
      _
    $region19: #{tpu_custom_call.1} parent=1 // pred_check_branch
      %32 = sbr.rel (0) target = $region21
    $region20: #{tpu_custom_call.1} parent=1 // pred_region
      %34 = vsyncadd [#allocation3], 0
      %s35 = sshll.u32 %s4, 4
      %s36 = int_to_ptr.hbm [resolvable:$true] %s35
      %s37 = sshll.u32 [#allocation2], 4
      %s38 = int_to_ptr.vmem [resolvable:$true] %s37
      %43 = dma.hbm_to_vmem [thread:$0]  %s36, 384, %s38, [#allocation3], 128, 128, 8
    $region21: #{tpu_custom_call.1} parent=1 // pred_fallthru
      _
    // Predicated region
    $region22: #{tpu_custom_call.1} parent=1 // pred_check
      _
    $region23: #{tpu_custom_call.1} parent=1 // pred_check_branch
      %45 = sbr.rel (0) target = $region25
    $region24: #{tpu_custom_call.1} parent=1 // pred_region
      _
    $region25: #{tpu_custom_call.1} parent=1 // pred_fallthru
      _
    // Predicated region
    $region26: #{tpu_custom_call.1} parent=1 // pred_check
      _
    $region27: #{tpu_custom_call.1} parent=1 // pred_check_branch
      %47 = sbr.rel (0) target = $region29
    $region28: #{tpu_custom_call.1} parent=1 // pred_region
      _
    $region29: #{tpu_custom_call.1} parent=1 // pred_fallthru
      _
    // Predicated region
    $region30: #{tpu_custom_call.1} parent=1 // pred_check
      _
    $region31: #{tpu_custom_call.1} parent=1 // pred_check_branch
      %49 = sbr.rel (0) target = $region33
    $region32: #{tpu_custom_call.1} parent=1 // pred_region
      _
    $region33: #{tpu_custom_call.1} parent=1 // pred_fallthru
      _
    // Predicated region
    $region34: #{tpu_custom_call.1} parent=1 // pred_check
      _
    $region35: #{tpu_custom_call.1} parent=1 // pred_check_branch
      %51 = sbr.rel (0) target = $region37
    $region36: #{tpu_custom_call.1} parent=1 // pred_region
      _
    $region37: #{tpu_custom_call.1} parent=1 // pred_fallthru
      _
    // Predicated region
    $region38: #{tpu_custom_call.1} parent=1 // pred_check
      _
    $region39: #{tpu_custom_call.1} parent=1 // pred_check_branch
      %53 = sbr.rel (0) target = $region41
    $region40: #{tpu_custom_call.1} parent=1 // pred_region
      _
    $region41: #{tpu_custom_call.1} parent=1 // pred_fallthru
      _
    // Predicated region
    $region42: #{tpu_custom_call.1} parent=1 // pred_check
      _
    $region43: #{tpu_custom_call.1} parent=1 // pred_check_branch
      %55 = sbr.rel (0) target = $region45
    $region44: #{tpu_custom_call.1} parent=1 // pred_region
      _
    $region45: #{tpu_custom_call.1} parent=1 // pred_fallthru
      _
    // Predicated region
    $region46: #{tpu_custom_call.1} parent=1 // pred_check
      _
    $region47: #{tpu_custom_call.1} parent=1 // pred_check_branch
      %57 = sbr.rel (0) target = $region49
    $region48: #{tpu_custom_call.1} parent=1 // pred_region
      _
    $region49: #{tpu_custom_call.1} parent=1 // pred_fallthru
      _
    // Predicated region
    $region50: #{tpu_custom_call.1} parent=1 // pred_check
      _
    $region51: #{tpu_custom_call.1} parent=1 // pred_check_branch
      %59 = sbr.rel (0) target = $region53
    $region52: #{tpu_custom_call.1} parent=1 // pred_region
      _
    $region53: #{tpu_custom_call.1} parent=1 // pred_fallthru
      _
    // Predicated region
    $region54: #{tpu_custom_call.1} parent=1 // pred_check
      _
    $region55: #{tpu_custom_call.1} parent=1 // pred_check_branch
      %61 = sbr.rel (0) target = $region57
    $region56: #{tpu_custom_call.1} parent=1 // pred_region
      _
    $region57: #{tpu_custom_call.1} parent=1 // pred_fallthru
      _
    // Predicated region
    $region58: #{tpu_custom_call.1} parent=1 // pred_check
      _
    $region59: #{tpu_custom_call.1} parent=1 // pred_check_branch
      %63 = sbr.rel (0) target = $region61
    $region60: #{tpu_custom_call.1} parent=1 // pred_region
      _
    $region61: #{tpu_custom_call.1} parent=1 // pred_fallthru
      _
    // Predicated region
    $region62: #{tpu_custom_call.1} parent=1 // pred_check
      _
    $region63: #{tpu_custom_call.1} parent=1 // pred_check_branch
      %65 = sbr.rel (0) target = $region65
    $region64: #{tpu_custom_call.1} parent=1 // pred_region
      _
    $region65: #{tpu_custom_call.1} parent=1 // pred_fallthru
      _
    // Predicated region
    $region66: #{tpu_custom_call.1} parent=1 // pred_check
      _
    $region67: #{tpu_custom_call.1} parent=1 // pred_check_branch
      %67 = sbr.rel (0) target = $region69
    $region68: #{tpu_custom_call.1} parent=1 // pred_region
      %69 = dma.done [#allocation3], 384
    $region69: #{tpu_custom_call.1} parent=1 // pred_fallthru
      _
    %v70 = vld [vmem:[%s2] sm:$0xff]
    %v71 = vld [vmem:[%s2 + $0x8] sm:$0xff]
    %v72 = vld [vmem:[%s3] sm:$0xf]
    %v73 = vld [vmem:[%s3 + $0x4] sm:$0xf]
    %v74 = vld [vmem:[%s0] sm:$0xf]
    %v75 = vld [vmem:[%s0 + $0x4] sm:$0xf]
    %vm76 = vcmask 31744
    %v78 = vsel %vm76, %v74, 0
    %vm80 = vcmask 1043456
    %v82 = vsel %vm80, %v72, 0
    %84 = vmatpush.msra.mxu0 0.0
    %85 = vmatpush.msra.mxu0 0.0
    %86 = vmatpush.msra.mxu0 0.0
    %87 = vmatpush.msra.mxu0 0.0
    %88 = vmatpush.msra.mxu0 0.0
    %89 = vmatpush.msra.mxu0 0.0
    %90 = vmatpush.msra.mxu0 0.0
    %91 = vmatpush.msra.mxu0 0.0
    %92 = vmatpush.msra.mxu0 0.0
    %93 = vmatpush.msra.mxu0 0.0
    %94 = vmatpush.msra.mxu0 0.0
    %95 = vmatpush.msra.mxu0 0.0
    %96 = vmatpush.msra.mxu0 0.0
    %97 = vmatpush.msra.mxu0 0.0
    %98 = vmatpush.msra.mxu0 0.0
    %99 = vmatpush.msra.mxu0 %v82
    %100 = vmatmul.bf16.gmra.mxu0 %v78
    %v101 = vpop.f32.mrf.mxu0
    %v102 = vadd.f32 0.0, %v101
    %v103 = vpop.f32.mrf.mxu0
    %104 = vdwg.mxu0
    %v106 = vsel %vm76, %v75, 0
    %v109 = vsel %vm80, %v73, 0
    %111 = vmatpush.msra.mxu0 0.0
    %112 = vmatpush.msra.mxu0 0.0
    %113 = vmatpush.msra.mxu0 0.0
    %114 = vmatpush.msra.mxu0 0.0
    %115 = vmatpush.msra.mxu0 0.0
    %116 = vmatpush.msra.mxu0 0.0
    %117 = vmatpush.msra.mxu0 0.0
    %118 = vmatpush.msra.mxu0 0.0
    %119 = vmatpush.msra.mxu0 0.0
    %120 = vmatpush.msra.mxu0 0.0
    %121 = vmatpush.msra.mxu0 0.0
    %122 = vmatpush.msra.mxu0 0.0
    %123 = vmatpush.msra.mxu0 0.0
    %124 = vmatpush.msra.mxu0 0.0
    %125 = vmatpush.msra.mxu0 0.0
    %126 = vmatpush.msra.mxu0 %v109
    %127 = vmatmul.bf16.gmra.mxu0 %v106
    %v128 = vpop.f32.mrf.mxu0
    %v129 = vadd.f32 0.0, %v128
    %v130 = vpop.f32.mrf.mxu0
    %131 = vdwg.mxu0
    %v132 = vld [vmem:[%s1] sm:$0xf]
    %v133 = vld [vmem:[%s1 + $0x4] sm:$0xf]
    %v134 = vld [vmem:[%s1 + $0x8] sm:$0xf]
    %v135 = vld [vmem:[%s1 + $0xc] sm:$0xf]
    %v138 = vunpack.c.l.b16 %v132
    %v139 = vunpack.c.l.b16 %v133
    %v140 = vpack.c.b16 %v139, %v138
    %vm141 = vcmask 64512
    %v143 = vsel %vm141, %v140, 0
    %145 = vmatpush.msra.mxu0 0.0
    %146 = vmatpush.msra.mxu0 0.0
    %147 = vmatpush.msra.mxu0 0.0
    %148 = vmatpush.msra.mxu0 0.0
    %149 = vmatpush.msra.mxu0 0.0
    %150 = vmatpush.msra.mxu0 0.0
    %151 = vmatpush.msra.mxu0 0.0
    %152 = vmatpush.msra.mxu0 0.0
    %153 = vmatpush.msra.mxu0 0.0
    %154 = vmatpush.msra.mxu0 0.0
    %155 = vmatpush.msra.mxu0 0.0
    %156 = vmatpush.msra.mxu0 0.0
    %157 = vmatpush.msra.mxu0 0.0
    %158 = vmatpush.msra.mxu0 0.0
    %159 = vmatpush.msra.mxu0 0.0
    %160 = vmatpush.msra.mxu0 %v70
    %161 = vmatmul.bf16.gmra.mxu0 %v143
    %v162 = vpop.f32.mrf.mxu0
    %v163 = vadd.f32 0.0, %v162
    %v164 = vpop.f32.mrf.mxu0
    %v165 = vadd.f32 0.0, %v164
    %166 = vdwg.mxu0
    %v169 = vunpack.c.l.b16 %v134
    %v170 = vunpack.c.l.b16 %v135
    %v171 = vpack.c.b16 %v170, %v169
    %v173 = vsel %vm141, %v171, 0
    %175 = vmatpush.msra.mxu0 0.0
    %176 = vmatpush.msra.mxu0 0.0
    %177 = vmatpush.msra.mxu0 0.0
    %178 = vmatpush.msra.mxu0 0.0
    %179 = vmatpush.msra.mxu0 0.0
    %180 = vmatpush.msra.mxu0 0.0
    %181 = vmatpush.msra.mxu0 0.0
    %182 = vmatpush.msra.mxu0 0.0
    %183 = vmatpush.msra.mxu0 0.0
    %184 = vmatpush.msra.mxu0 0.0
    %185 = vmatpush.msra.mxu0 0.0
    %186 = vmatpush.msra.mxu0 0.0
    %187 = vmatpush.msra.mxu0 0.0
    %188 = vmatpush.msra.mxu0 0.0
    %189 = vmatpush.msra.mxu0 0.0
    %190 = vmatpush.msra.mxu0 %v71
    %191 = vmatmul.bf16.gmra.mxu0 %v173
    %v192 = vpop.f32.mrf.mxu0
    %v193 = vadd.f32 0.0, %v192
    %v194 = vpop.f32.mrf.mxu0
    %v195 = vadd.f32 0.0, %v194
    %196 = vdwg.mxu0
    %199 = vrot.lane.b32.xlu0 %v163, 3
    %v200 = vpop.permute.xlu0 %199
    %201 = vrot.lane.b32.xlu0 %v193, 3
    %v202 = vpop.permute.xlu0 %201
    %207 = vrot.lane.b32.xlu0 %v165, 9
    %v208 = vpop.permute.xlu0 %207
    %209 = vrot.lane.b32.xlu0 %v195, 9
    %v210 = vpop.permute.xlu0 %209
    %215 = vrot.lane.b32.xlu0 %v70, 15
    %v216 = vpop.permute.xlu0 %215
    %217 = vrot.lane.b32.xlu0 %v71, 15
    %v218 = vpop.permute.xlu0 %217
    %vm221 = vcmask 23552
    %v222 = vsel %vm221, %v102, %v200
    %v223 = vsel %vm221, %v129, %v202
    %vm224 = vcmask 72704
    %v225 = vsel %vm224, %v222, %v208
    %v226 = vsel %vm224, %v223, %v210
    %vm227 = vcmask 121856
    %v228 = vsel %vm227, %v225, %v216
    %v229 = vsel %vm227, %v226, %v218
    %v230 = vld [vmem:[#allocation2] sm:$0xff]
    %v231 = vld [vmem:[#allocation2 + $0x8] sm:$0xff]
    %v232 = vld [vmem:[#allocation2 + $0x10] sm:$0x1f]
    %v233 = vld [vmem:[%s5] sm:$0x1]
    %v235 = vperm.slane %v233, 0
    %vm237 = vcmask 171008
    %v239 = vsel %vm237, %v228, 0
    %v242 = vsel %vm237, %v229, 0
    %vm244 = vcmask 1044480
    %v246 = vsel %vm244, %v232, 0
    %248 = vmatpush.msra.mxu0 0.0
    %249 = vmatpush.msra.mxu0 0.0
    %250 = vmatpush.msra.mxu0 0.0
    %251 = vmatpush.msra.mxu0 0.0
    %252 = vmatpush.msra.mxu0 0.0
    %253 = vmatpush.msra.mxu0 0.0
    %254 = vmatpush.msra.mxu0 0.0
    %255 = vmatpush.msra.mxu0 0.0
    %256 = vmatpush.msra.mxu0 0.0
    %257 = vmatpush.msra.mxu0 0.0
    %258 = vmatpush.msra.mxu0 0.0
    %259 = vmatpush.msra.mxu0 0.0
    %260 = vmatpush.msra.mxu0 0.0
    %261 = vmatpush.msra.mxu0 %v246
    %262 = vmatpush.msra.mxu0 %v231
    %263 = vmatpush.msra.mxu0 %v230
    %264 = vmatmul.f32.gmra.mxu0 %v239
    %v265 = vpop.f32.mrf.mxu0
    %v266 = vadd.f32 %v235, %v265
    %267 = vmatmul.f32.gmra.mxu0 %v242
    %v268 = vpop.f32.mrf.mxu0
    %v269 = vadd.f32 %v235, %v268
    %270 = vdwg.mxu0
    %vm271 = vcmp.gt.f32.partialorder %v266, 0.0
    %vm272 = vcmp.gt.f32.partialorder %v269, 0.0
    %v273 = vmin.f32 %v266, 0.0
    %v274 = vmin.f32 %v269, 0.0
    %v275 = vmul.f32 %v273, 1.442695
    %v276 = vpow.pop %v275
    %v277 = vmul.f32 %v274, 1.442695
    %v278 = vpow.pop %v277
    %v279 = vsub.f32 %v276, 1.0
    %v280 = vsub.f32 %v278, 1.0
    %v281 = vsel %vm271, %v266, %v279
    %v282 = vsel %vm272, %v269, %v280
    %v283 = vld [vmem:[%s6] sm:$0xff]
    %v284 = vld [vmem:[%s6 + $0x8] sm:$0xff]
    %v285 = vld [vmem:[%s6 + $0x10] sm:$0xff]
    %v286 = vld [vmem:[%s6 + $0x18] sm:$0xff]
    %v287 = vld [vmem:[%s6 + $0x20] sm:$0xff]
    %v288 = vld [vmem:[%s6 + $0x28] sm:$0xff]
    %v289 = vld [vmem:[%s6 + $0x30] sm:$0xff]
    %v290 = vld [vmem:[%s6 + $0x38] sm:$0xff]
    %v291 = vld [vmem:[%s6 + $0x40] sm:$0xff]
    %v292 = vld [vmem:[%s6 + $0x48] sm:$0xff]
    %v293 = vld [vmem:[%s6 + $0x50] sm:$0xff]
    %v294 = vld [vmem:[%s6 + $0x58] sm:$0xff]
    %v295 = vld [vmem:[%s6 + $0x60] sm:$0xff]
    %v296 = vld [vmem:[%s6 + $0x68] sm:$0xff]
    %v297 = vld [vmem:[%s6 + $0x70] sm:$0xff]
    %v298 = vld [vmem:[%s6 + $0x78] sm:$0xff]
    %v299 = vld [vmem:[%s7] sm:$0x1]
    %v301 = vperm.slane %v299, 0
    %303 = vmatpush.msra.mxu0 %v298
    %304 = vmatpush.msra.mxu0 %v297
    %305 = vmatpush.msra.mxu0 %v296
    %306 = vmatpush.msra.mxu0 %v295
    %307 = vmatpush.msra.mxu0 %v294
    %308 = vmatpush.msra.mxu0 %v293
    %309 = vmatpush.msra.mxu0 %v292
    %310 = vmatpush.msra.mxu0 %v291
    %311 = vmatpush.msra.mxu0 %v290
    %312 = vmatpush.msra.mxu0 %v289
    %313 = vmatpush.msra.mxu0 %v288
    %314 = vmatpush.msra.mxu0 %v287
    %315 = vmatpush.msra.mxu0 %v286
    %316 = vmatpush.msra.mxu0 %v285
    %317 = vmatpush.msra.mxu0 %v284
    %318 = vmatpush.msra.mxu0 %v283
    %319 = vmatmul.f32.gmra.mxu0 %v281
    %v320 = vpop.f32.mrf.mxu0
    %v321 = vadd.f32 %v301, %v320
    %322 = vmatmul.f32.gmra.mxu0 %v282
    %v323 = vpop.f32.mrf.mxu0
    %v324 = vadd.f32 %v301, %v323
    %325 = vdwg.mxu0
    %vm326 = vcmp.gt.f32.partialorder %v321, 0.0
    %vm327 = vcmp.gt.f32.partialorder %v324, 0.0
    %v328 = vmin.f32 %v321, 0.0
    %v329 = vmin.f32 %v324, 0.0
    %v330 = vmul.f32 %v328, 1.442695
    %v331 = vpow.pop %v330
    %v332 = vmul.f32 %v329, 1.442695
    %v333 = vpow.pop %v332
    %v334 = vsub.f32 %v331, 1.0
    %v335 = vsub.f32 %v333, 1.0
    %v336 = vsel %vm326, %v321, %v334
    %v337 = vsel %vm327, %v324, %v335
    %v338 = vld [vmem:[%s8] sm:$0xff]
    %v339 = vld [vmem:[%s8 + $0x8] sm:$0xff]
    %v340 = vld [vmem:[%s8 + $0x10] sm:$0xff]
    %v341 = vld [vmem:[%s8 + $0x18] sm:$0xff]
    %v342 = vld [vmem:[%s8 + $0x20] sm:$0xff]
    %v343 = vld [vmem:[%s8 + $0x28] sm:$0xff]
    %v344 = vld [vmem:[%s8 + $0x30] sm:$0xff]
    %v345 = vld [vmem:[%s8 + $0x38] sm:$0xff]
    %v346 = vld [vmem:[%s8 + $0x40] sm:$0xff]
    %v347 = vld [vmem:[%s8 + $0x48] sm:$0xff]
    %v348 = vld [vmem:[%s8 + $0x50] sm:$0xff]
    %v349 = vld [vmem:[%s8 + $0x58] sm:$0xff]
    %v350 = vld [vmem:[%s8 + $0x60] sm:$0xff]
    %v351 = vld [vmem:[%s8 + $0x68] sm:$0xff]
    %v352 = vld [vmem:[%s8 + $0x70] sm:$0xff]
    %v353 = vld [vmem:[%s8 + $0x78] sm:$0xff]
    %v354 = vld [vmem:[%s9] sm:$0x1]
    %v356 = vperm.slane %v354, 0
    %358 = vmatpush.msra.mxu0 %v353
    %359 = vmatpush.msra.mxu0 %v352
    %360 = vmatpush.msra.mxu0 %v351
    %361 = vmatpush.msra.mxu0 %v350
    %362 = vmatpush.msra.mxu0 %v349
    %363 = vmatpush.msra.mxu0 %v348
    %364 = vmatpush.msra.mxu0 %v347
    %365 = vmatpush.msra.mxu0 %v346
    %366 = vmatpush.msra.mxu0 %v345
    %367 = vmatpush.msra.mxu0 %v344
    %368 = vmatpush.msra.mxu0 %v343
    %369 = vmatpush.msra.mxu0 %v342
    %370 = vmatpush.msra.mxu0 %v341
    %371 = vmatpush.msra.mxu0 %v340
    %372 = vmatpush.msra.mxu0 %v339
    %373 = vmatpush.msra.mxu0 %v338
    %374 = vmatmul.f32.gmra.mxu0 %v336
    %v375 = vpop.f32.mrf.mxu0
    %v376 = vadd.f32 %v356, %v375
    %377 = vmatmul.f32.gmra.mxu0 %v337
    %v378 = vpop.f32.mrf.mxu0
    %v379 = vadd.f32 %v356, %v378
    %380 = vdwg.mxu0
    %vm381 = vcmp.gt.f32.partialorder %v376, 0.0
    %vm382 = vcmp.gt.f32.partialorder %v379, 0.0
    %v383 = vmin.f32 %v376, 0.0
    %v384 = vmin.f32 %v379, 0.0
    %v385 = vmul.f32 %v383, 1.442695
    %v386 = vpow.pop %v385
    %v387 = vmul.f32 %v384, 1.442695
    %v388 = vpow.pop %v387
    %v389 = vsub.f32 %v386, 1.0
    %v390 = vsub.f32 %v388, 1.0
    %v391 = vsel %vm381, %v376, %v389
    %v392 = vsel %vm382, %v379, %v390
    %v393 = vld [vmem:[%s10] sm:$0xff]
    %v394 = vld [vmem:[%s10 + $0x8] sm:$0xff]
    %v395 = vld [vmem:[%s10 + $0x10] sm:$0xff]
    %v396 = vld [vmem:[%s10 + $0x18] sm:$0xff]
    %v397 = vld [vmem:[%s11] sm:$0x1]
    %v399 = vperm.slane %v397, 0
    %vm401 = vcmask 261120
    %v403 = vsel %vm401, %v391, 0
    %v406 = vsel %vm401, %v392, 0
    %408 = vmatpush.msra.mxu0 0.0
    %409 = vmatpush.msra.mxu0 0.0
    %410 = vmatpush.msra.mxu0 0.0
    %411 = vmatpush.msra.mxu0 0.0
    %412 = vmatpush.msra.mxu0 0.0
    %413 = vmatpush.msra.mxu0 0.0
    %414 = vmatpush.msra.mxu0 0.0
    %415 = vmatpush.msra.mxu0 0.0
    %416 = vmatpush.msra.mxu0 0.0
    %417 = vmatpush.msra.mxu0 0.0
    %418 = vmatpush.msra.mxu0 0.0
    %419 = vmatpush.msra.mxu0 0.0
    %420 = vmatpush.msra.mxu0 %v396
    %421 = vmatpush.msra.mxu0 %v395
    %422 = vmatpush.msra.mxu0 %v394
    %423 = vmatpush.msra.mxu0 %v393
    %424 = vmatmul.f32.gmra.mxu0 %v403
    %v425 = vpop.f32.mrf.mxu0
    %v426 = vadd.f32 %v399, %v425
    %427 = vmatmul.f32.gmra.mxu0 %v406
    %v428 = vpop.f32.mrf.mxu0
    %v429 = vadd.f32 %v399, %v428
    %430 = vdwg.mxu0
    %vm431 = vcmp.gt.f32.partialorder %v426, 0.0
    %vm432 = vcmp.gt.f32.partialorder %v429, 0.0
    %v433 = vmin.f32 %v426, 0.0
    %v434 = vmin.f32 %v429, 0.0
    %v435 = vmul.f32 %v433, 1.442695
    %v436 = vpow.pop %v435
    %v437 = vmul.f32 %v434, 1.442695
    %v438 = vpow.pop %v437
    %v439 = vsub.f32 %v436, 1.0
    %v440 = vsub.f32 %v438, 1.0
    %v441 = vsel %vm431, %v426, %v439
    %v442 = vsel %vm432, %v429, %v440
    %v443 = vld [vmem:[%s12] sm:$0xff]
    %v444 = vld [vmem:[%s12 + $0x8] sm:$0xff]
    %v445 = vld [vmem:[%s12 + $0x10] sm:$0xff]
    %v446 = vld [vmem:[%s12 + $0x18] sm:$0xff]
    %v447 = vld [vmem:[%s13] sm:$0x1]
    %v449 = vperm.slane %v447, 0
    %v452 = vsel %vm401, %v441, 0
    %v455 = vsel %vm401, %v442, 0
    %457 = vmatpush.msra.mxu0 0.0
    %458 = vmatpush.msra.mxu0 0.0
    %459 = vmatpush.msra.mxu0 0.0
    %460 = vmatpush.msra.mxu0 0.0
    %461 = vmatpush.msra.mxu0 0.0
    %462 = vmatpush.msra.mxu0 0.0
    %463 = vmatpush.msra.mxu0 0.0
    %464 = vmatpush.msra.mxu0 0.0
    %465 = vmatpush.msra.mxu0 0.0
    %466 = vmatpush.msra.mxu0 0.0
    %467 = vmatpush.msra.mxu0 0.0
    %468 = vmatpush.msra.mxu0 0.0
    %469 = vmatpush.msra.mxu0 %v446
    %470 = vmatpush.msra.mxu0 %v445
    %471 = vmatpush.msra.mxu0 %v444
    %472 = vmatpush.msra.mxu0 %v443
    %473 = vmatmul.f32.gmra.mxu0 %v452
    %v474 = vpop.f32.mrf.mxu0
    %v475 = vadd.f32 %v449, %v474
    %476 = vmatmul.f32.gmra.mxu0 %v455
    %v477 = vpop.f32.mrf.mxu0
    %v478 = vadd.f32 %v449, %v477
    %479 = vdwg.mxu0
    %vm480 = vcmp.gt.f32.partialorder %v475, 0.0
    %vm481 = vcmp.gt.f32.partialorder %v478, 0.0
    %v482 = vmin.f32 %v475, 0.0
    %v483 = vmin.f32 %v478, 0.0
    %v484 = vmul.f32 %v482, 1.442695
    %v485 = vpow.pop %v484
    %v486 = vmul.f32 %v483, 1.442695
    %v487 = vpow.pop %v486
    %v488 = vsub.f32 %v485, 1.0
    %v489 = vsub.f32 %v487, 1.0
    %v490 = vsel %vm480, %v475, %v488
    %v491 = vsel %vm481, %v478, %v489
    %v492 = vld [vmem:[%s14] sm:$0xff]
    %v493 = vld [vmem:[%s14 + $0x8] sm:$0xff]
    %v494 = vld [vmem:[%s14 + $0x10] sm:$0xff]
    %v495 = vld [vmem:[%s14 + $0x18] sm:$0xff]
    %v496 = vld [vmem:[%s15] sm:$0x1]
    %v498 = vperm.slane %v496, 0
    %v501 = vsel %vm401, %v490, 0
    %v504 = vsel %vm401, %v491, 0
    %506 = vmatpush.msra.mxu0 0.0
    %507 = vmatpush.msra.mxu0 0.0
    %508 = vmatpush.msra.mxu0 0.0
    %509 = vmatpush.msra.mxu0 0.0
    %510 = vmatpush.msra.mxu0 0.0
    %511 = vmatpush.msra.mxu0 0.0
    %512 = vmatpush.msra.mxu0 0.0
    %513 = vmatpush.msra.mxu0 0.0
    %514 = vmatpush.msra.mxu0 0.0
    %515 = vmatpush.msra.mxu0 0.0
    %516 = vmatpush.msra.mxu0 0.0
    %517 = vmatpush.msra.mxu0 0.0
    %518 = vmatpush.msra.mxu0 %v495
    %519 = vmatpush.msra.mxu0 %v494
    %520 = vmatpush.msra.mxu0 %v493
    %521 = vmatpush.msra.mxu0 %v492
    %522 = vmatmul.f32.gmra.mxu0 %v501
    %v523 = vpop.f32.mrf.mxu0
    %v524 = vadd.f32 %v498, %v523
    %525 = vmatmul.f32.gmra.mxu0 %v504
    %v526 = vpop.f32.mrf.mxu0
    %v527 = vadd.f32 %v498, %v526
    %528 = vdwg.mxu0
    %v531 = vrot.slane %v527, 7
    %vm532 = vcmask 1041409
    %v533 = vsel %vm532, %v531, %v524
    %vm535 = vcmask 58368
    %536 = vst.msk [vmem:[#allocation5] sm:$0x3] %vm535, %v533
    %vm537 = vcmask 1042434
    %v538 = vsel %vm537, %v531, %v524
    %539 = vrot.lane.b32.xlu0 %v538, 8
    %v540 = vpop.permute.xlu0 %539
    %vm542 = vcmask 124993
    %543 = vst.msk [vmem:[#allocation5 - $0x1] sm:$0x6] %vm542, %v540
    %vm544 = vcmask 1043459
    %v545 = vsel %vm544, %v531, %v524
    %546 = vrot.lane.b32.xlu0 %v545, 16
    %v547 = vpop.permute.xlu0 %546
    %vm549 = vcmask 191618
    %550 = vst.msk [vmem:[#allocation5 - $0x2] sm:$0xc] %vm549, %v547
    %vm551 = vcmask 1044484
    %v552 = vsel %vm551, %v531, %v524
    %553 = vrot.lane.b32.xlu0 %v552, 24
    %v554 = vpop.permute.xlu0 %553
    %vm556 = vcmask 258243
    %557 = vst.msk [vmem:[#allocation5 - $0x3] sm:$0x18] %vm556, %v554
    %vm558 = vcmask 1045509
    %v559 = vsel %vm558, %v531, %v524
    %560 = vrot.lane.b32.xlu0 %v559, 32
    %v561 = vpop.permute.xlu0 %560
    %vm563 = vcmask 324868
    %564 = vst.msk [vmem:[#allocation5 - $0x4] sm:$0x30] %vm563, %v561
    %vm565 = vcmask 1046534
    %v566 = vsel %vm565, %v531, %v524
    %567 = vrot.lane.b32.xlu0 %v566, 40
    %v568 = vpop.permute.xlu0 %567
    %vm570 = vcmask 391493
    %571 = vst.msk [vmem:[#allocation5 - $0x5] sm:$0x60] %vm570, %v568
    %vm572 = vcmask 1047559
    %v573 = vsel %vm572, %v531, %v524
    %574 = vrot.lane.b32.xlu0 %v573, 48
    %v575 = vpop.permute.xlu0 %574
    %vm577 = vcmask 458118
    %578 = vst.msk [vmem:[#allocation5 - $0x6] sm:$0xc0] %vm577, %v575
    %579 = vrot.lane.b32.xlu0 %v524, 56
    %v580 = vpop.permute.xlu0 %579
    %581 = vrot.lane.b32.xlu0 %v531, 56
    %v582 = vpop.permute.xlu0 %581
    %vm585 = vcmask 523719
    %586 = vst.msk [vmem:[#allocation5 - $0x7] sm:$0x80] %vm585, %v580
    %vm587 = vcmask 516544
    %588 = vst.msk [vmem:[#allocation5 + $0x1] sm:$0x1] %vm587, %v582
    // Predicated region
    $region70: #{tpu_custom_call.1} parent=1 // pred_check
      _
    $region71: #{tpu_custom_call.1} parent=1 // pred_check_branch
      %590 = sbr.rel (0) target = $region73
    $region72: #{tpu_custom_call.1} parent=1 // pred_region
      %592 = vsyncadd [#allocation4], 0
      %s594 = sshll.u32 [#allocation5], 4
      %s595 = int_to_ptr.vmem [resolvable:$true] %s594
      %s596 = sshll.u32 %s16, 4
      %s597 = int_to_ptr.hbm [resolvable:$true] %s596
      %599 = dma.vmem_to_hbm [thread:$0]  %s595, 32, %s597, [#allocation4]
    $region73: #{tpu_custom_call.1} parent=1 // pred_fallthru
      _
    // Predicated region
    $region74: #{tpu_custom_call.1} parent=1 // pred_check
      _
    $region75: #{tpu_custom_call.1} parent=1 // pred_check_branch
      %601 = sbr.rel (0) target = $region77
    $region76: #{tpu_custom_call.1} parent=1 // pred_region
      %603 = dma.done [#allocation4], 32
    $region77: #{tpu_custom_call.1} parent=1 // pred_fallthru
      _
    %604 = vsyncpa [#allocation3], 1
    %605 = vsyncpa [#allocation4], 1

// kernel: tpu_custom_call.1
$region0: #{tpu_custom_call.1}
  #allocation0 [shape = 'u32[]', space=smem, size = 0x4, offset = 0x4, fixed_abs, tag = 'smem constant byte address 0x4 - core index']
  #allocation1 [shape = 'u32[72,128]{1,0:T(1,128)}', space=vmem, size = 0x9000, scoped, tag = 'internal scratch']
  %s0 = inlined_call_operand.vmem [shape: bf16[2,8,4], index: 0, kind: input, shape index: {}]
  %s1 = inlined_call_operand.vmem [shape: bf16[2,16,8], index: 1, kind: input, shape index: {}]
  %s2 = inlined_call_operand.vmem [shape: f32[2,8,6], index: 2, kind: input, shape index: {}]
  %s3 = inlined_call_operand.vmem [shape: f32[2,4,3], index: 3, kind: input, shape index: {}]
  %s4 = inlined_call_operand.hbm [shape: f32[21,128], index: 4, kind: input, shape index: {}]
  %s5 = inlined_call_operand.vmem [shape: f32[1,128], index: 5, kind: input, shape index: {}]
  %s6 = inlined_call_operand.vmem [shape: f32[128,128], index: 6, kind: input, shape index: {}]
  %s7 = inlined_call_operand.vmem [shape: f32[1,128], index: 7, kind: input, shape index: {}]
  %s8 = inlined_call_operand.vmem [shape: f32[128,32], index: 8, kind: input, shape index: {}]
  %s9 = inlined_call_operand.vmem [shape: f32[1,32], index: 9, kind: input, shape index: {}]
  %s10 = inlined_call_operand.vmem [shape: f32[32,32], index: 10, kind: input, shape index: {}]
  %s11 = inlined_call_operand.vmem [shape: f32[1,32], index: 11, kind: input, shape index: {}]
  %s12 = inlined_call_operand.vmem [shape: f32[32,32], index: 12, kind: input, shape index: {}]
  %s13 = inlined_call_operand.vmem [shape: f32[1,32], index: 13, kind: input, shape index: {}]
  %s14 = inlined_call_operand.vmem [shape: f32[32,8], index: 14, kind: input, shape index: {}]
  %s15 = inlined_call_operand.vmem [shape: f32[1,8], index: 15, kind: input, shape index: {}]
  %s16 = inlined_call_operand.hbm [shape: f32[2,64], index: 16, kind: output, shape index: {}]
  %s17 = sld [smem:[#allocation0]]
  $region78: #{tpu_custom_call.1} parent=0
    _
  %s19 = ssub.s32 1, %s17
  %s20 = scalar_select 0, %s19, %s17
  $region1: #{tpu_custom_call.1} parent=0
    #allocation2 [shape = 'u8[12288]{0}', space=vmem, size = 0x3000, scoped, tag = 'input window, operand 4, single buffered']
    #allocation3 [shape = 's32[1]{0}', space=sflag, size = 0x4, scoped, tag = 'scoped memory for tpu_custom_call.1']
    #allocation4 [shape = 's32[1]{0}', space=sflag, size = 0x4, scoped, tag = 'scoped memory for tpu_custom_call.1']
    #allocation5 [shape = 'u8[1024]{0}', space=vmem, size = 0x400, scoped, tag = 'output window, operand 0, single buffered']
    %21 = vsyncpa [#allocation3], 0
    %22 = vsyncpa [#allocation4], 0
    // Predicated region
    $region2: #{tpu_custom_call.1} parent=1 // pred_check
      _
    $region3: #{tpu_custom_call.1} parent=1 // pred_check_branch
      %24 = sbr.rel (0) target = $region5
    $region4: #{tpu_custom_call.1} parent=1 // pred_region
      _
    $region5: #{tpu_custom_call.1} parent=1 // pred_fallthru
      _
    // Predicated region
    $region6: #{tpu_custom_call.1} parent=1 // pred_check
      _
    $region7: #{tpu_custom_call.1} parent=1 // pred_check_branch
      %26 = sbr.rel (0) target = $region9
    $region8: #{tpu_custom_call.1} parent=1 // pred_region
      _
    $region9: #{tpu_custom_call.1} parent=1 // pred_fallthru
      _
    // Predicated region
    $region10: #{tpu_custom_call.1} parent=1 // pred_check
      _
    $region11: #{tpu_custom_call.1} parent=1 // pred_check_branch
      %28 = sbr.rel (0) target = $region13
    $region12: #{tpu_custom_call.1} parent=1 // pred_region
      _
    $region13: #{tpu_custom_call.1} parent=1 // pred_fallthru
      _
    // Predicated region
    $region14: #{tpu_custom_call.1} parent=1 // pred_check
      _
    $region15: #{tpu_custom_call.1} parent=1 // pred_check_branch
      %30 = sbr.rel (0) target = $region17
    $region16: #{tpu_custom_call.1} parent=1 // pred_region
      _
    $region17: #{tpu_custom_call.1} parent=1 // pred_fallthru
      _
    // Predicated region
    $region18: #{tpu_custom_call.1} parent=1 // pred_check
      _
    $region19: #{tpu_custom_call.1} parent=1 // pred_check_branch
      %32 = sbr.rel (0) target = $region21
    $region20: #{tpu_custom_call.1} parent=1 // pred_region
      %34 = vsyncadd [#allocation3], 0
      %s35 = sshll.u32 %s4, 4
      %s36 = int_to_ptr.hbm [resolvable:$true] %s35
      %s37 = sshll.u32 [#allocation2], 4
      %s38 = int_to_ptr.vmem [resolvable:$true] %s37
      %43 = dma.hbm_to_vmem [thread:$0]  %s36, 384, %s38, [#allocation3], 128, 128, 8
    $region21: #{tpu_custom_call.1} parent=1 // pred_fallthru
      _
    // Predicated region
    $region22: #{tpu_custom_call.1} parent=1 // pred_check
      _
    $region23: #{tpu_custom_call.1} parent=1 // pred_check_branch
      %45 = sbr.rel (0) target = $region25
    $region24: #{tpu_custom_call.1} parent=1 // pred_region
      _
    $region25: #{tpu_custom_call.1} parent=1 // pred_fallthru
      _
    // Predicated region
    $region26: #{tpu_custom_call.1} parent=1 // pred_check
      _
    $region27: #{tpu_custom_call.1} parent=1 // pred_check_branch
      %47 = sbr.rel (0) target = $region29
    $region28: #{tpu_custom_call.1} parent=1 // pred_region
      _
    $region29: #{tpu_custom_call.1} parent=1 // pred_fallthru
      _
    // Predicated region
    $region30: #{tpu_custom_call.1} parent=1 // pred_check
      _
    $region31: #{tpu_custom_call.1} parent=1 // pred_check_branch
      %49 = sbr.rel (0) target = $region33
    $region32: #{tpu_custom_call.1} parent=1 // pred_region
      _
    $region33: #{tpu_custom_call.1} parent=1 // pred_fallthru
      _
    // Predicated region
    $region34: #{tpu_custom_call.1} parent=1 // pred_check
      _
    $region35: #{tpu_custom_call.1} parent=1 // pred_check_branch
      %51 = sbr.rel (0) target = $region37
    $region36: #{tpu_custom_call.1} parent=1 // pred_region
      _
    $region37: #{tpu_custom_call.1} parent=1 // pred_fallthru
      _
    // Predicated region
    $region38: #{tpu_custom_call.1} parent=1 // pred_check
      _
    $region39: #{tpu_custom_call.1} parent=1 // pred_check_branch
      %53 = sbr.rel (0) target = $region41
    $region40: #{tpu_custom_call.1} parent=1 // pred_region
      _
    $region41: #{tpu_custom_call.1} parent=1 // pred_fallthru
      _
    // Predicated region
    $region42: #{tpu_custom_call.1} parent=1 // pred_check
      _
    $region43: #{tpu_custom_call.1} parent=1 // pred_check_branch
      %55 = sbr.rel (0) target = $region45
    $region44: #{tpu_custom_call.1} parent=1 // pred_region
      _
    $region45: #{tpu_custom_call.1} parent=1 // pred_fallthru
      _
    // Predicated region
    $region46: #{tpu_custom_call.1} parent=1 // pred_check
      _
    $region47: #{tpu_custom_call.1} parent=1 // pred_check_branch
      %57 = sbr.rel (0) target = $region49
    $region48: #{tpu_custom_call.1} parent=1 // pred_region
      _
    $region49: #{tpu_custom_call.1} parent=1 // pred_fallthru
      _
    // Predicated region
    $region50: #{tpu_custom_call.1} parent=1 // pred_check
      _
    $region51: #{tpu_custom_call.1} parent=1 // pred_check_branch
      %59 = sbr.rel (0) target = $region53
    $region52: #{tpu_custom_call.1} parent=1 // pred_region
      _
    $region53: #{tpu_custom_call.1} parent=1 // pred_fallthru
      _
    // Predicated region
    $region54: #{tpu_custom_call.1} parent=1 // pred_check
      _
    $region55: #{tpu_custom_call.1} parent=1 // pred_check_branch
      %61 = sbr.rel (0) target = $region57
    $region56: #{tpu_custom_call.1} parent=1 // pred_region
      _
    $region57: #{tpu_custom_call.1} parent=1 // pred_fallthru
      _
    // Predicated region
    $region58: #{tpu_custom_call.1} parent=1 // pred_check
      _
    $region59: #{tpu_custom_call.1} parent=1 // pred_check_branch
      %63 = sbr.rel (0) target = $region61
    $region60: #{tpu_custom_call.1} parent=1 // pred_region
      _
    $region61: #{tpu_custom_call.1} parent=1 // pred_fallthru
      _
    // Predicated region
    $region62: #{tpu_custom_call.1} parent=1 // pred_check
      _
    $region63: #{tpu_custom_call.1} parent=1 // pred_check_branch
      %65 = sbr.rel (0) target = $region65
    $region64: #{tpu_custom_call.1} parent=1 // pred_region
      _
    $region65: #{tpu_custom_call.1} parent=1 // pred_fallthru
      _
    // Predicated region
    $region66: #{tpu_custom_call.1} parent=1 // pred_check
      _
    $region67: #{tpu_custom_call.1} parent=1 // pred_check_branch
      %67 = sbr.rel (0) target = $region69
    $region68: #{tpu_custom_call.1} parent=1 // pred_region
      %69 = dma.done [#allocation3], 384
    $region69: #{tpu_custom_call.1} parent=1 // pred_fallthru
      _
    %v70 = vld [vmem:[%s2] sm:$0xff]
    %v71 = vld [vmem:[%s2 + $0x8] sm:$0xff]
    %v72 = vld [vmem:[%s3] sm:$0xf]
    %v73 = vld [vmem:[%s3 + $0x4] sm:$0xf]
    %v74 = vld [vmem:[%s0] sm:$0xf]
    %v75 = vld [vmem:[%s0 + $0x4] sm:$0xf]
    %vm76 = vcmask 31744
    %v78 = vsel %vm76, %v74, 0
    %vm80 = vcmask 1043456
    %v82 = vsel %vm80, %v72, 0
    %84 = vmatpush.msra.mxu0 0.0
    %85 = vmatpush.msra.mxu0 0.0
    %86 = vmatpush.msra.mxu0 0.0
    %87 = vmatpush.msra.mxu0 0.0
    %88 = vmatpush.msra.mxu0 0.0
    %89 = vmatpush.msra.mxu0 0.0
    %90 = vmatpush.msra.mxu0 0.0
    %91 = vmatpush.msra.mxu0 0.0
    %92 = vmatpush.msra.mxu0 0.0
    %93 = vmatpush.msra.mxu0 0.0
    %94 = vmatpush.msra.mxu0 0.0
    %95 = vmatpush.msra.mxu0 0.0
    %96 = vmatpush.msra.mxu0 0.0
    %97 = vmatpush.msra.mxu0 0.0
    %98 = vmatpush.msra.mxu0 0.0
    %99 = vmatpush.msra.mxu0 %v82
    %100 = vmatmul.bf16.gmra.mxu0 %v78
    %v101 = vpop.f32.mrf.mxu0
    %v102 = vadd.f32 0.0, %v101
    %v103 = vpop.f32.mrf.mxu0
    %104 = vdwg.mxu0
    %v106 = vsel %vm76, %v75, 0
    %v109 = vsel %vm80, %v73, 0
    %111 = vmatpush.msra.mxu0 0.0
    %112 = vmatpush.msra.mxu0 0.0
    %113 = vmatpush.msra.mxu0 0.0
    %114 = vmatpush.msra.mxu0 0.0
    %115 = vmatpush.msra.mxu0 0.0
    %116 = vmatpush.msra.mxu0 0.0
    %117 = vmatpush.msra.mxu0 0.0
    %118 = vmatpush.msra.mxu0 0.0
    %119 = vmatpush.msra.mxu0 0.0
    %120 = vmatpush.msra.mxu0 0.0
    %121 = vmatpush.msra.mxu0 0.0
    %122 = vmatpush.msra.mxu0 0.0
    %123 = vmatpush.msra.mxu0 0.0
    %124 = vmatpush.msra.mxu0 0.0
    %125 = vmatpush.msra.mxu0 0.0
    %126 = vmatpush.msra.mxu0 %v109
    %127 = vmatmul.bf16.gmra.mxu0 %v106
    %v128 = vpop.f32.mrf.mxu0
    %v129 = vadd.f32 0.0, %v128
    %v130 = vpop.f32.mrf.mxu0
    %131 = vdwg.mxu0
    %v132 = vld [vmem:[%s1] sm:$0xf]
    %v133 = vld [vmem:[%s1 + $0x4] sm:$0xf]
    %v134 = vld [vmem:[%s1 + $0x8] sm:$0xf]
    %v135 = vld [vmem:[%s1 + $0xc] sm:$0xf]
    %v138 = vunpack.c.l.b16 %v132
    %v139 = vunpack.c.l.b16 %v133
    %v140 = vpack.c.b16 %v139, %v138
    %vm141 = vcmask 64512
    %v143 = vsel %vm141, %v140, 0
    %145 = vmatpush.msra.mxu0 0.0
    %146 = vmatpush.msra.mxu0 0.0
    %147 = vmatpush.msra.mxu0 0.0
    %148 = vmatpush.msra.mxu0 0.0
    %149 = vmatpush.msra.mxu0 0.0
    %150 = vmatpush.msra.mxu0 0.0
    %151 = vmatpush.msra.mxu0 0.0
    %152 = vmatpush.msra.mxu0 0.0
    %153 = vmatpush.msra.mxu0 0.0
    %154 = vmatpush.msra.mxu0 0.0
    %155 = vmatpush.msra.mxu0 0.0
    %156 = vmatpush.msra.mxu0 0.0
    %157 = vmatpush.msra.mxu0 0.0
    %158 = vmatpush.msra.mxu0 0.0
    %159 = vmatpush.msra.mxu0 0.0
    %160 = vmatpush.msra.mxu0 %v70
    %161 = vmatmul.bf16.gmra.mxu0 %v143
    %v162 = vpop.f32.mrf.mxu0
    %v163 = vadd.f32 0.0, %v162
    %v164 = vpop.f32.mrf.mxu0
    %v165 = vadd.f32 0.0, %v164
    %166 = vdwg.mxu0
    %v169 = vunpack.c.l.b16 %v134
    %v170 = vunpack.c.l.b16 %v135
    %v171 = vpack.c.b16 %v170, %v169
    %v173 = vsel %vm141, %v171, 0
    %175 = vmatpush.msra.mxu0 0.0
    %176 = vmatpush.msra.mxu0 0.0
    %177 = vmatpush.msra.mxu0 0.0
    %178 = vmatpush.msra.mxu0 0.0
    %179 = vmatpush.msra.mxu0 0.0
    %180 = vmatpush.msra.mxu0 0.0
    %181 = vmatpush.msra.mxu0 0.0
    %182 = vmatpush.msra.mxu0 0.0
    %183 = vmatpush.msra.mxu0 0.0
    %184 = vmatpush.msra.mxu0 0.0
    %185 = vmatpush.msra.mxu0 0.0
    %186 = vmatpush.msra.mxu0 0.0
    %187 = vmatpush.msra.mxu0 0.0
    %188 = vmatpush.msra.mxu0 0.0
    %189 = vmatpush.msra.mxu0 0.0
    %190 = vmatpush.msra.mxu0 %v71
    %191 = vmatmul.bf16.gmra.mxu0 %v173
    %v192 = vpop.f32.mrf.mxu0
    %v193 = vadd.f32 0.0, %v192
    %v194 = vpop.f32.mrf.mxu0
    %v195 = vadd.f32 0.0, %v194
    %196 = vdwg.mxu0
    %199 = vrot.lane.b32.xlu0 %v163, 3
    %v200 = vpop.permute.xlu0 %199
    %201 = vrot.lane.b32.xlu0 %v193, 3
    %v202 = vpop.permute.xlu0 %201
    %207 = vrot.lane.b32.xlu0 %v165, 9
    %v208 = vpop.permute.xlu0 %207
    %209 = vrot.lane.b32.xlu0 %v195, 9
    %v210 = vpop.permute.xlu0 %209
    %215 = vrot.lane.b32.xlu0 %v70, 15
    %v216 = vpop.permute.xlu0 %215
    %217 = vrot.lane.b32.xlu0 %v71, 15
    %v218 = vpop.permute.xlu0 %217
    %vm221 = vcmask 23552
    %v222 = vsel %vm221, %v102, %v200
    %v223 = vsel %vm221, %v129, %v202
    %vm224 = vcmask 72704
    %v225 = vsel %vm224, %v222, %v208
    %v226 = vsel %vm224, %v223, %v210
    %vm227 = vcmask 121856
    %v228 = vsel %vm227, %v225, %v216
    %v229 = vsel %vm227, %v226, %v218
    %v230 = vld [vmem:[#allocation2] sm:$0xff]
    %v231 = vld [vmem:[#allocation2 + $0x8] sm:$0xff]
    %v232 = vld [vmem:[#allocation2 + $0x10] sm:$0x1f]
    %v233 = vld [vmem:[%s5] sm:$0x1]
    %v235 = vperm.slane %v233, 0
    %vm237 = vcmask 171008
    %v239 = vsel %vm237, %v228, 0
    %v242 = vsel %vm237, %v229, 0
    %vm244 = vcmask 1044480
    %v246 = vsel %vm244, %v232, 0
    %248 = vmatpush.msra.mxu0 0.0
    %249 = vmatpush.msra.mxu0 0.0
    %250 = vmatpush.msra.mxu0 0.0
    %251 = vmatpush.msra.mxu0 0.0
    %252 = vmatpush.msra.mxu0 0.0
    %253 = vmatpush.msra.mxu0 0.0
    %254 = vmatpush.msra.mxu0 0.0
    %255 = vmatpush.msra.mxu0 0.0
    %256 = vmatpush.msra.mxu0 0.0
    %257 = vmatpush.msra.mxu0 0.0
    %258 = vmatpush.msra.mxu0 0.0
    %259 = vmatpush.msra.mxu0 0.0
    %260 = vmatpush.msra.mxu0 0.0
    %261 = vmatpush.msra.mxu0 %v246
    %262 = vmatpush.msra.mxu0 %v231
    %263 = vmatpush.msra.mxu0 %v230
    %264 = vmatmul.f32.gmra.mxu0 %v239
    %v265 = vpop.f32.mrf.mxu0
    %v266 = vadd.f32 %v235, %v265
    %267 = vmatmul.f32.gmra.mxu0 %v242
    %v268 = vpop.f32.mrf.mxu0
    %v269 = vadd.f32 %v235, %v268
    %270 = vdwg.mxu0
    %vm271 = vcmp.gt.f32.partialorder %v266, 0.0
    %vm272 = vcmp.gt.f32.partialorder %v269, 0.0
    %v273 = vmin.f32 %v266, 0.0
    %v274 = vmin.f32 %v269, 0.0
    %v275 = vmul.f32 %v273, 1.442695
    %v276 = vpow.pop %v275
    %v277 = vmul.f32 %v274, 1.442695
    %v278 = vpow.pop %v277
    %v279 = vsub.f32 %v276, 1.0
    %v280 = vsub.f32 %v278, 1.0
    %v281 = vsel %vm271, %v266, %v279
    %v282 = vsel %vm272, %v269, %v280
    %v283 = vld [vmem:[%s6] sm:$0xff]
    %v284 = vld [vmem:[%s6 + $0x8] sm:$0xff]
    %v285 = vld [vmem:[%s6 + $0x10] sm:$0xff]
    %v286 = vld [vmem:[%s6 + $0x18] sm:$0xff]
    %v287 = vld [vmem:[%s6 + $0x20] sm:$0xff]
    %v288 = vld [vmem:[%s6 + $0x28] sm:$0xff]
    %v289 = vld [vmem:[%s6 + $0x30] sm:$0xff]
    %v290 = vld [vmem:[%s6 + $0x38] sm:$0xff]
    %v291 = vld [vmem:[%s6 + $0x40] sm:$0xff]
    %v292 = vld [vmem:[%s6 + $0x48] sm:$0xff]
    %v293 = vld [vmem:[%s6 + $0x50] sm:$0xff]
    %v294 = vld [vmem:[%s6 + $0x58] sm:$0xff]
    %v295 = vld [vmem:[%s6 + $0x60] sm:$0xff]
    %v296 = vld [vmem:[%s6 + $0x68] sm:$0xff]
    %v297 = vld [vmem:[%s6 + $0x70] sm:$0xff]
    %v298 = vld [vmem:[%s6 + $0x78] sm:$0xff]
    %v299 = vld [vmem:[%s7] sm:$0x1]
    %v301 = vperm.slane %v299, 0
    %303 = vmatpush.msra.mxu0 %v298
    %304 = vmatpush.msra.mxu0 %v297
    %305 = vmatpush.msra.mxu0 %v296
    %306 = vmatpush.msra.mxu0 %v295
    %307 = vmatpush.msra.mxu0 %v294
    %308 = vmatpush.msra.mxu0 %v293
    %309 = vmatpush.msra.mxu0 %v292
    %310 = vmatpush.msra.mxu0 %v291
    %311 = vmatpush.msra.mxu0 %v290
    %312 = vmatpush.msra.mxu0 %v289
    %313 = vmatpush.msra.mxu0 %v288
    %314 = vmatpush.msra.mxu0 %v287
    %315 = vmatpush.msra.mxu0 %v286
    %316 = vmatpush.msra.mxu0 %v285
    %317 = vmatpush.msra.mxu0 %v284
    %318 = vmatpush.msra.mxu0 %v283
    %319 = vmatmul.f32.gmra.mxu0 %v281
    %v320 = vpop.f32.mrf.mxu0
    %v321 = vadd.f32 %v301, %v320
    %322 = vmatmul.f32.gmra.mxu0 %v282
    %v323 = vpop.f32.mrf.mxu0
    %v324 = vadd.f32 %v301, %v323
    %325 = vdwg.mxu0
    %vm326 = vcmp.gt.f32.partialorder %v321, 0.0
    %vm327 = vcmp.gt.f32.partialorder %v324, 0.0
    %v328 = vmin.f32 %v321, 0.0
    %v329 = vmin.f32 %v324, 0.0
    %v330 = vmul.f32 %v328, 1.442695
    %v331 = vpow.pop %v330
    %v332 = vmul.f32 %v329, 1.442695
    %v333 = vpow.pop %v332
    %v334 = vsub.f32 %v331, 1.0
    %v335 = vsub.f32 %v333, 1.0
    %v336 = vsel %vm326, %v321, %v334
    %v337 = vsel %vm327, %v324, %v335
    %v338 = vld [vmem:[%s8] sm:$0xff]
    %v339 = vld [vmem:[%s8 + $0x8] sm:$0xff]
    %v340 = vld [vmem:[%s8 + $0x10] sm:$0xff]
    %v341 = vld [vmem:[%s8 + $0x18] sm:$0xff]
    %v342 = vld [vmem:[%s8 + $0x20] sm:$0xff]
    %v343 = vld [vmem:[%s8 + $0x28] sm:$0xff]
    %v344 = vld [vmem:[%s8 + $0x30] sm:$0xff]
    %v345 = vld [vmem:[%s8 + $0x38] sm:$0xff]
    %v346 = vld [vmem:[%s8 + $0x40] sm:$0xff]
    %v347 = vld [vmem:[%s8 + $0x48] sm:$0xff]
    %v348 = vld [vmem:[%s8 + $0x50] sm:$0xff]
    %v349 = vld [vmem:[%s8 + $0x58] sm:$0xff]
    %v350 = vld [vmem:[%s8 + $0x60] sm:$0xff]
    %v351 = vld [vmem:[%s8 + $0x68] sm:$0xff]
    %v352 = vld [vmem:[%s8 + $0x70] sm:$0xff]
    %v353 = vld [vmem:[%s8 + $0x78] sm:$0xff]
    %v354 = vld [vmem:[%s9] sm:$0x1]
    %v356 = vperm.slane %v354, 0
    %358 = vmatpush.msra.mxu0 %v353
    %359 = vmatpush.msra.mxu0 %v352
    %360 = vmatpush.msra.mxu0 %v351
    %361 = vmatpush.msra.mxu0 %v350
    %362 = vmatpush.msra.mxu0 %v349
    %363 = vmatpush.msra.mxu0 %v348
    %364 = vmatpush.msra.mxu0 %v347
    %365 = vmatpush.msra.mxu0 %v346
    %366 = vmatpush.msra.mxu0 %v345
    %367 = vmatpush.msra.mxu0 %v344
    %368 = vmatpush.msra.mxu0 %v343
    %369 = vmatpush.msra.mxu0 %v342
    %370 = vmatpush.msra.mxu0 %v341
    %371 = vmatpush.msra.mxu0 %v340
    %372 = vmatpush.msra.mxu0 %v339
    %373 = vmatpush.msra.mxu0 %v338
    %374 = vmatmul.f32.gmra.mxu0 %v336
    %v375 = vpop.f32.mrf.mxu0
    %v376 = vadd.f32 %v356, %v375
    %377 = vmatmul.f32.gmra.mxu0 %v337
    %v378 = vpop.f32.mrf.mxu0
    %v379 = vadd.f32 %v356, %v378
    %380 = vdwg.mxu0
    %vm381 = vcmp.gt.f32.partialorder %v376, 0.0
    %vm382 = vcmp.gt.f32.partialorder %v379, 0.0
    %v383 = vmin.f32 %v376, 0.0
    %v384 = vmin.f32 %v379, 0.0
    %v385 = vmul.f32 %v383, 1.442695
    %v386 = vpow.pop %v385
    %v387 = vmul.f32 %v384, 1.442695
    %v388 = vpow.pop %v387
    %v389 = vsub.f32 %v386, 1.0
    %v390 = vsub.f32 %v388, 1.0
    %v391 = vsel %vm381, %v376, %v389
    %v392 = vsel %vm382, %v379, %v390
    %v393 = vld [vmem:[%s10] sm:$0xff]
    %v394 = vld [vmem:[%s10 + $0x8] sm:$0xff]
    %v395 = vld [vmem:[%s10 + $0x10] sm:$0xff]
    %v396 = vld [vmem:[%s10 + $0x18] sm:$0xff]
    %v397 = vld [vmem:[%s11] sm:$0x1]
    %v399 = vperm.slane %v397, 0
    %vm401 = vcmask 261120
    %v403 = vsel %vm401, %v391, 0
    %v406 = vsel %vm401, %v392, 0
    %408 = vmatpush.msra.mxu0 0.0
    %409 = vmatpush.msra.mxu0 0.0
    %410 = vmatpush.msra.mxu0 0.0
    %411 = vmatpush.msra.mxu0 0.0
    %412 = vmatpush.msra.mxu0 0.0
    %413 = vmatpush.msra.mxu0 0.0
    %414 = vmatpush.msra.mxu0 0.0
    %415 = vmatpush.msra.mxu0 0.0
    %416 = vmatpush.msra.mxu0 0.0
    %417 = vmatpush.msra.mxu0 0.0
    %418 = vmatpush.msra.mxu0 0.0
    %419 = vmatpush.msra.mxu0 0.0
    %420 = vmatpush.msra.mxu0 %v396
    %421 = vmatpush.msra.mxu0 %v395
    %422 = vmatpush.msra.mxu0 %v394
    %423 = vmatpush.msra.mxu0 %v393
    %424 = vmatmul.f32.gmra.mxu0 %v403
    %v425 = vpop.f32.mrf.mxu0
    %v426 = vadd.f32 %v399, %v425
    %427 = vmatmul.f32.gmra.mxu0 %v406
    %v428 = vpop.f32.mrf.mxu0
    %v429 = vadd.f32 %v399, %v428
    %430 = vdwg.mxu0
    %vm431 = vcmp.gt.f32.partialorder %v426, 0.0
    %vm432 = vcmp.gt.f32.partialorder %v429, 0.0
    %v433 = vmin.f32 %v426, 0.0
    %v434 = vmin.f32 %v429, 0.0
    %v435 = vmul.f32 %v433, 1.442695
    %v436 = vpow.pop %v435
    %v437 = vmul.f32 %v434, 1.442695
    %v438 = vpow.pop %v437
    %v439 = vsub.f32 %v436, 1.0
    %v440 = vsub.f32 %v438, 1.0
    %v441 = vsel %vm431, %v426, %v439
    %v442 = vsel %vm432, %v429, %v440
    %v443 = vld [vmem:[%s12] sm:$0xff]
    %v444 = vld [vmem:[%s12 + $0x8] sm:$0xff]
    %v445 = vld [vmem:[%s12 + $0x10] sm:$0xff]
    %v446 = vld [vmem:[%s12 + $0x18] sm:$0xff]
    %v447 = vld [vmem:[%s13] sm:$0x1]
    %v449 = vperm.slane %v447, 0
    %v452 = vsel %vm401, %v441, 0
    %v455 = vsel %vm401, %v442, 0
    %457 = vmatpush.msra.mxu0 0.0
    %458 = vmatpush.msra.mxu0 0.0
    %459 = vmatpush.msra.mxu0 0.0
    %460 = vmatpush.msra.mxu0 0.0
    %461 = vmatpush.msra.mxu0 0.0
    %462 = vmatpush.msra.mxu0 0.0
    %463 = vmatpush.msra.mxu0 0.0
    %464 = vmatpush.msra.mxu0 0.0
    %465 = vmatpush.msra.mxu0 0.0
    %466 = vmatpush.msra.mxu0 0.0
    %467 = vmatpush.msra.mxu0 0.0
    %468 = vmatpush.msra.mxu0 0.0
    %469 = vmatpush.msra.mxu0 %v446
    %470 = vmatpush.msra.mxu0 %v445
    %471 = vmatpush.msra.mxu0 %v444
    %472 = vmatpush.msra.mxu0 %v443
    %473 = vmatmul.f32.gmra.mxu0 %v452
    %v474 = vpop.f32.mrf.mxu0
    %v475 = vadd.f32 %v449, %v474
    %476 = vmatmul.f32.gmra.mxu0 %v455
    %v477 = vpop.f32.mrf.mxu0
    %v478 = vadd.f32 %v449, %v477
    %479 = vdwg.mxu0
    %vm480 = vcmp.gt.f32.partialorder %v475, 0.0
    %vm481 = vcmp.gt.f32.partialorder %v478, 0.0
    %v482 = vmin.f32 %v475, 0.0
    %v483 = vmin.f32 %v478, 0.0
    %v484 = vmul.f32 %v482, 1.442695
    %v485 = vpow.pop %v484
    %v486 = vmul.f32 %v483, 1.442695
    %v487 = vpow.pop %v486
    %v488 = vsub.f32 %v485, 1.0
    %v489 = vsub.f32 %v487, 1.0
    %v490 = vsel %vm480, %v475, %v488
    %v491 = vsel %vm481, %v478, %v489
    %v492 = vld [vmem:[%s14] sm:$0xff]
    %v493 = vld [vmem:[%s14 + $0x8] sm:$0xff]
    %v494 = vld [vmem:[%s14 + $0x10] sm:$0xff]
    %v495 = vld [vmem:[%s14 + $0x18] sm:$0xff]
    %v496 = vld [vmem:[%s15] sm:$0x1]
    %v498 = vperm.slane %v496, 0
    %v501 = vsel %vm401, %v490, 0
    %v504 = vsel %vm401, %v491, 0
    %506 = vmatpush.msra.mxu0 0.0
    %507 = vmatpush.msra.mxu0 0.0
    %508 = vmatpush.msra.mxu0 0.0
    %509 = vmatpush.msra.mxu0 0.0
    %510 = vmatpush.msra.mxu0 0.0
    %511 = vmatpush.msra.mxu0 0.0
    %512 = vmatpush.msra.mxu0 0.0
    %513 = vmatpush.msra.mxu0 0.0
    %514 = vmatpush.msra.mxu0 0.0
    %515 = vmatpush.msra.mxu0 0.0
    %516 = vmatpush.msra.mxu0 0.0
    %517 = vmatpush.msra.mxu0 0.0
    %518 = vmatpush.msra.mxu0 %v495
    %519 = vmatpush.msra.mxu0 %v494
    %520 = vmatpush.msra.mxu0 %v493
    %521 = vmatpush.msra.mxu0 %v492
    %522 = vmatmul.f32.gmra.mxu0 %v501
    %v523 = vpop.f32.mrf.mxu0
    %v524 = vadd.f32 %v498, %v523
    %525 = vmatmul.f32.gmra.mxu0 %v504
    %v526 = vpop.f32.mrf.mxu0
    %v527 = vadd.f32 %v498, %v526
    %528 = vdwg.mxu0
    %v531 = vrot.slane %v527, 7
    %vm532 = vcmask 1041409
    %v533 = vsel %vm532, %v531, %v524
    %vm535 = vcmask 58368
    %536 = vst.msk [vmem:[#allocation5] sm:$0x3] %vm535, %v533
    %vm537 = vcmask 1042434
    %v538 = vsel %vm537, %v531, %v524
    %539 = vrot.lane.b32.xlu0 %v538, 8
    %v540 = vpop.permute.xlu0 %539
    %vm542 = vcmask 124993
    %543 = vst.msk [vmem:[#allocation5 - $0x1] sm:$0x6] %vm542, %v540
    %vm544 = vcmask 1043459
    %v545 = vsel %vm544, %v531, %v524
    %546 = vrot.lane.b32.xlu0 %v545, 16
    %v547 = vpop.permute.xlu0 %546
    %vm549 = vcmask 191618
    %550 = vst.msk [vmem:[#allocation5 - $0x2] sm:$0xc] %vm549, %v547
    %vm551 = vcmask 1044484
    %v552 = vsel %vm551, %v531, %v524
    %553 = vrot.lane.b32.xlu0 %v552, 24
    %v554 = vpop.permute.xlu0 %553
    %vm556 = vcmask 258243
    %557 = vst.msk [vmem:[#allocation5 - $0x3] sm:$0x18] %vm556, %v554
    %vm558 = vcmask 1045509
    %v559 = vsel %vm558, %v531, %v524
    %560 = vrot.lane.b32.xlu0 %v559, 32
    %v561 = vpop.permute.xlu0 %560
    %vm563 = vcmask 324868
    %564 = vst.msk [vmem:[#allocation5 - $0x4] sm:$0x30] %vm563, %v561
    %vm565 = vcmask 1046534
    %v566 = vsel %vm565, %v531, %v524
    %567 = vrot.lane.b32.xlu0 %v566, 40
    %v568 = vpop.permute.xlu0 %567
    %vm570 = vcmask 391493
    %571 = vst.msk [vmem:[#allocation5 - $0x5] sm:$0x60] %vm570, %v568
    %vm572 = vcmask 1047559
    %v573 = vsel %vm572, %v531, %v524
    %574 = vrot.lane.b32.xlu0 %v573, 48
    %v575 = vpop.permute.xlu0 %574
    %vm577 = vcmask 458118
    %578 = vst.msk [vmem:[#allocation5 - $0x6] sm:$0xc0] %vm577, %v575
    %579 = vrot.lane.b32.xlu0 %v524, 56
    %v580 = vpop.permute.xlu0 %579
    %581 = vrot.lane.b32.xlu0 %v531, 56
    %v582 = vpop.permute.xlu0 %581
    %vm585 = vcmask 523719
    %586 = vst.msk [vmem:[#allocation5 - $0x7] sm:$0x80] %vm585, %v580
    %vm587 = vcmask 516544
    %588 = vst.msk [vmem:[#allocation5 + $0x1] sm:$0x1] %vm587, %v582
    // Predicated region
    $region70: #{tpu_custom_call.1} parent=1 // pred_check
      _
    $region71: #{tpu_custom_call.1} parent=1 // pred_check_branch
      %590 = sbr.rel (0) target = $region73
    $region72: #{tpu_custom_call.1} parent=1 // pred_region
      %592 = vsyncadd [#allocation4], 0
      %s594 = sshll.u32 [#allocation5], 4
      %s595 = int_to_ptr.vmem [resolvable:$true] %s594
      %s596 = sshll.u32 %s16, 4
      %s597 = int_to_ptr.hbm [resolvable:$true] %s596
      %599 = dma.vmem_to_hbm [thread:$0]  %s595, 32, %s597, [#allocation4]
    $region73: #{tpu_custom_call.1} parent=1 // pred_fallthru
      _
    // Predicated region
    $region74: #{tpu_custom_call.1} parent=1 // pred_check
      _
    $region75: #{tpu_custom_call.1} parent=1 // pred_check_branch
      %601 = sbr.rel (0) target = $region77
    $region76: #{tpu_custom_call.1} parent=1 // pred_region
      %603 = dma.done [#allocation4], 32
    $region77: #{tpu_custom_call.1} parent=1 // pred_fallthru
      _
    %604 = vsyncpa [#allocation3], 1
    %605 = vsyncpa [#allocation4], 1

</llo_original>
